<compile_context>
chip_gen: v5e
topology: v5e:2x2
jax: 0.10.0
libtpu: 0.0.40
codegen_flags: <defaults>
</compile_context>

<pallas_src>
import functools

import jax
import jax.numpy as jnp
from jax.experimental import pallas as pl
from jax.experimental.pallas import tpu as pltpu


# ----------------------------------------------------------------------------
# Fused kernel: whole BottleNeck forward for one image per grid step.
# ----------------------------------------------------------------------------
def _bottleneck_kernel(H, W,
                       x_ref, w1_ref, b1_ref, w2_ref, b2_ref, w3_ref,
                       ws_ref, bs_ref, o_ref, h1p_ref):
    """
    x_ref : (1, Cin, H*W)   f32   input image, channel-major (flattened NCHW)
    w1_ref: (Cin, C)        bf16  1x1 conv, BN1 scale folded in
    b1_ref: (1, C)          f32   BN1 shift
    w2_ref: (9*C, C)        bf16  3x3 conv (taps flattened dy,dx,cin), BN2 scale folded
    b2_ref: (1, C)          f32   BN2 shift
    w3_ref: (C, C)          bf16  last 1x1 conv of residual branch (no BN)
    ws_ref: (Cin, C)        bf16  shortcut 1x1 conv, BN_s scale folded in
    bs_ref: (1, C)          f32   BN_s shift
    o_ref : (1, C, H*W)     f32   output, channel-major (flattened NCHW)
    h1p_ref: (H+2, W+2, C)  f32   VMEM scratch: zero-padded stage-1 activation
    """
    C = o_ref.shape[1]

    # ---- load input; row-major (pixels, channels); bf16 for the MXU --------
    x_cm = x_ref[0]                                    # (Cin, H*W) f32
    x = jnp.transpose(x_cm).astype(jnp.bfloat16)       # (H*W, Cin) bf16

    # ---- stage 1: 1x1 conv (BN scale folded) + shift + ReLU ----------------
    h1 = jnp.dot(x, w1_ref[...], preferred_element_type=jnp.float32)
    h1 = jnp.maximum(h1 + b1_ref[...], 0.0)            # (H*W, C) f32

    # ---- stage 2: 3x3 conv (padding=1) as ONE K=9C contraction -------------
    # Zero the padded scratch, then write the interior (border stays zero).
    h1p_ref[...] = jnp.zeros_like(h1p_ref)
    h1p_ref[pl.ds(1, H), pl.ds(1, W), :] = h1.reshape(H, W, C)

    taps = [h1p_ref[pl.ds(dy, H), pl.ds(dx, W), :]
            for dy in range(3) for dx in range(3)]
    patch = jnp.concatenate(taps, axis=-1)             # (H, W, 9C) f32
    patch = patch.reshape(H * W, 9 * C).astype(jnp.bfloat16)

    h2 = jnp.dot(patch, w2_ref[...], preferred_element_type=jnp.float32)
    h2 = jnp.maximum(h2 + b2_ref[...], 0.0).astype(jnp.bfloat16)   # (H*W, C)

    # ---- stage 3: residual 1x1 conv + shortcut (1x1 conv + BN) + add + ReLU
    res = jnp.dot(h2, w3_ref[...], preferred_element_type=jnp.float32)
    shc = jnp.dot(x, ws_ref[...], preferred_element_type=jnp.float32)
    shc = shc + bs_ref[...]
    out = jnp.maximum(res + shc, 0.0)                  # (H*W, C) f32

    # Store channel-major (C, H*W): lane-dense writeback, already NCHW order.
    o_ref[0] = jnp.transpose(out).astype(o_ref.dtype)


# ----------------------------------------------------------------------------
# Parameters: synthetic weights, eval-mode BN folded (scale -> weights).
# ----------------------------------------------------------------------------
def _fold_bn(gamma, beta, mean, var, eps=1e-5):
    scale = gamma / jnp.sqrt(var + eps)
    shift = beta - mean * scale
    return scale, shift


def init_params(key, in_channels, out_channels):
    ks = jax.random.split(key, 7)
    f32, bf16 = jnp.float32, jnp.bfloat16
    C = out_channels

    def bn(k):
        k1, k2, k3, k4 = jax.random.split(k, 4)
        gamma = jax.random.uniform(k1, (C,), f32, 0.5, 1.5)
        beta = 0.1 * jax.random.normal(k2, (C,), f32)
        mean = 0.1 * jax.random.normal(k3, (C,), f32)
        var = jax.random.uniform(k4, (C,), f32, 0.5, 1.5)
        return _fold_bn(gamma, beta, mean, var)

    w1 = jax.random.normal(ks[0], (in_channels, C), f32) * (2.0 / in_channels) ** 0.5
    w2 = jax.random.normal(ks[1], (3, 3, C, C), f32) * (2.0 / (9 * C)) ** 0.5
    w3 = jax.random.normal(ks[2], (C, C), f32) * (2.0 / C) ** 0.5
    ws = jax.random.normal(ks[3], (in_channels, C), f32) * (2.0 / in_channels) ** 0.5
    s1, b1 = bn(ks[4])
    s2, b2 = bn(ks[5])
    ss, bs = bn(ks[6])

    return {
        "w1f": (w1 * s1[None, :]).astype(bf16),
        "b1": b1.reshape(1, C).astype(f32),
        "w2f": (w2 * s2[None, None, None, :]).reshape(9 * C, C).astype(bf16),
        "b2": b2.reshape(1, C).astype(f32),
        "w3": w3.astype(bf16),
        "wsf": (ws * ss[None, :]).astype(bf16),
        "bs": bs.reshape(1, C).astype(f32),
    }


# ----------------------------------------------------------------------------
# Forward: NCHW in / NCHW out, single pallas_call.
# ----------------------------------------------------------------------------
@jax.jit
def bottleneck_forward(x_nchw, params):
    N, Cin, H, W = x_nchw.shape
    C = params["w1f"].shape[1]
    HW = H * W
    x_flat = x_nchw.reshape(N, Cin, HW).astype(jnp.float32)   # free reshape

    out = pl.pallas_call(
        functools.partial(_bottleneck_kernel, H, W),
        out_shape=jax.ShapeDtypeStruct((N, C, HW), jnp.float32),
        grid_spec=pltpu.PrefetchScalarGridSpec(
            num_scalar_prefetch=0,
            grid=(N,),
            in_specs=[
                pl.BlockSpec((1, Cin, HW), lambda n: (n, 0, 0)),
                pl.BlockSpec((Cin, C), lambda n: (0, 0)),
                pl.BlockSpec((1, C), lambda n: (0, 0)),
                pl.BlockSpec((9 * C, C), lambda n: (0, 0)),
                pl.BlockSpec((1, C), lambda n: (0, 0)),
                pl.BlockSpec((C, C), lambda n: (0, 0)),
                pl.BlockSpec((Cin, C), lambda n: (0, 0)),
                pl.BlockSpec((1, C), lambda n: (0, 0)),
            ],
            out_specs=pl.BlockSpec((1, C, HW), lambda n: (n, 0, 0)),
            scratch_shapes=[pltpu.VMEM((H + 2, W + 2, C), jnp.float32)],
        ),
        compiler_params=pltpu.CompilerParams(
            dimension_semantics=("parallel",)),
    )(x_flat, params["w1f"], params["b1"], params["w2f"], params["b2"],
      params["w3"], params["wsf"], params["bs"])

    return out.reshape(N, C, H, W)


# ----------------------------------------------------------------------------
# Pure-JAX reference (same folded bf16 weights / f32 accumulation).
# ----------------------------------------------------------------------------
def _reference(x_nchw, p):
    N, Cin, H, W = x_nchw.shape
    C = p["w1f"].shape[1]
    x = jnp.transpose(x_nchw, (0, 2, 3, 1)).reshape(N, H * W, Cin)
    xb = x.astype(jnp.bfloat16)
    h1 = jnp.einsum("nmc,cd->nmd", xb, p["w1f"],
                    preferred_element_type=jnp.float32) + p["b1"]
    h1 = jnp.maximum(h1, 0.0).reshape(N, H, W, C)
    h1p = jnp.pad(h1, ((0, 0), (1, 1), (1, 1), (0, 0)))
    taps = [h1p[:, dy:dy + H, dx:dx + W, :]
            for dy in range(3) for dx in range(3)]
    patch = jnp.concatenate(taps, axis=-1).reshape(N, H * W, 9 * C)
    patch = patch.astype(jnp.bfloat16)
    h2 = jnp.einsum("nmk,kd->nmd", patch, p["w2f"],
                    preferred_element_type=jnp.float32) + p["b2"]
    h2 = jnp.maximum(h2, 0.0).astype(jnp.bfloat16)
    res = jnp.einsum("nmd,de->nme", h2, p["w3"],
                     preferred_element_type=jnp.float32)
    shc = jnp.einsum("nmc,cd->nmd", xb, p["wsf"],
                     preferred_element_type=jnp.float32) + p["bs"]
    out = jnp.maximum(res + shc, 0.0).reshape(N, H, W, C)
    return jnp.transpose(out, (0, 3, 1, 2))


if __name__ == "__main__":
    key = jax.random.PRNGKey(0)
    k_param, k_x = jax.random.split(key)

    in_channels, out_channels = 4, 8
    N, H, W = 2, 16, 16

    params = init_params(k_param, in_channels, out_channels)
    x = jax.random.normal(k_x, (N, in_channels, H, W), jnp.float32)

    y = bottleneck_forward(x, params)
    jax.block_until_ready(y)

    assert y.shape == (N, out_channels, H, W)
    assert bool(jnp.all(y >= 0.0))                     # final ReLU

    y_ref = _reference(x, params)
    assert bool(jnp.allclose(y, y_ref, atol=2e-2, rtol=2e-2)), (
        float(jnp.max(jnp.abs(y - y_ref))))

    print("KERNEL_OK")
</pallas_src>

<mosaic_0001>
module attributes {stable_mosaic.version = 11 : i64} {
  func.func @_bottleneck_kernel(%arg0: i32, %arg1: memref<1x4x256xf32, #tpu.memory_space<vmem>>, %arg2: memref<4x8xbf16, #tpu.memory_space<vmem>>, %arg3: memref<1x8xf32, #tpu.memory_space<vmem>>, %arg4: memref<72x8xbf16, #tpu.memory_space<vmem>>, %arg5: memref<1x8xf32, #tpu.memory_space<vmem>>, %arg6: memref<8x8xbf16, #tpu.memory_space<vmem>>, %arg7: memref<4x8xbf16, #tpu.memory_space<vmem>>, %arg8: memref<1x8xf32, #tpu.memory_space<vmem>>, %arg9: memref<1x8x256xf32, #tpu.memory_space<vmem>>, %arg10: memref<18x18x8xf32, #tpu.memory_space<vmem>>) attributes {dimension_semantics = [#tpu.dimension_semantics<parallel>], iteration_bounds = array<i64: 2>, scalar_prefetch = 0 : i64, scratch_operands = 1 : i64, tpu.core_type = #tpu.core_type<tc>, window_params = [{transform_indices = @transform_0, window_bounds = array<i64: 1, 4, 256>}, {pipeline_mode = #tpu.pipeline_mode<synchronous>, transform_indices = @transform_1, window_bounds = array<i64: 4, 8>}, {pipeline_mode = #tpu.pipeline_mode<synchronous>, transform_indices = @transform_2, window_bounds = array<i64: 1, 8>}, {pipeline_mode = #tpu.pipeline_mode<synchronous>, transform_indices = @transform_3, window_bounds = array<i64: 72, 8>}, {pipeline_mode = #tpu.pipeline_mode<synchronous>, transform_indices = @transform_4, window_bounds = array<i64: 1, 8>}, {pipeline_mode = #tpu.pipeline_mode<synchronous>, transform_indices = @transform_5, window_bounds = array<i64: 8, 8>}, {pipeline_mode = #tpu.pipeline_mode<synchronous>, transform_indices = @transform_6, window_bounds = array<i64: 4, 8>}, {pipeline_mode = #tpu.pipeline_mode<synchronous>, transform_indices = @transform_7, window_bounds = array<i64: 1, 8>}, {transform_indices = @transform_8, window_bounds = array<i64: 1, 8, 256>}]} {
    %c0 = arith.constant 0 : index
    %c0_0 = arith.constant 0 : index
    %c0_1 = arith.constant 0 : index
    %0 = vector.load %arg1[%c0, %c0_0, %c0_1] : memref<1x4x256xf32, #tpu.memory_space<vmem>>, vector<1x4x256xf32>
    %1 = vector.shape_cast %0 : vector<1x4x256xf32> to vector<4x256xf32>
    %2 = tpu.transpose %1, [1, 0] : vector<4x256xf32> -> vector<256x4xf32>
    %3 = arith.truncf %2 : vector<256x4xf32> to vector<256x4xbf16>
    %c0_2 = arith.constant 0 : index
    %c0_3 = arith.constant 0 : index
    %4 = vector.load %arg2[%c0_2, %c0_3] : memref<4x8xbf16, #tpu.memory_space<vmem>>, vector<4x8xbf16>
    %cst = arith.constant dense<0.000000e+00> : vector<256x8xf32>
    %5 = tpu.matmul %3, %4, %cst {dimension_numbers = #tpu.dot_dimension_numbers<[1], [0], [0], [1], [0, 0, 1, 1], [], []>} : vector<256x4xbf16>, vector<4x8xbf16>, vector<256x8xf32> -> vector<256x8xf32>
    %c0_4 = arith.constant 0 : index
    %c0_5 = arith.constant 0 : index
    %6 = vector.load %arg3[%c0_4, %c0_5] : memref<1x8xf32, #tpu.memory_space<vmem>>, vector<1x8xf32>
    %7 = vector.broadcast %6 : vector<1x8xf32> to vector<256x8xf32>
    %8 = arith.addf %5, %7 : vector<256x8xf32>
    %cst_6 = arith.constant 0.000000e+00 : f32
    %9 = vector.broadcast %cst_6 : f32 to vector<256x8xf32>
    %10 = arith.maximumf %8, %9 : vector<256x8xf32>
    %cst_7 = arith.constant 0.000000e+00 : f32
    %11 = vector.broadcast %cst_7 : f32 to vector<18x18x8xf32>
    %c0_8 = arith.constant 0 : index
    %c0_9 = arith.constant 0 : index
    %c0_10 = arith.constant 0 : index
    %12 = vector.load %arg10[%c0_8, %c0_9, %c0_10] : memref<18x18x8xf32, #tpu.memory_space<vmem>>, vector<18x18x8xf32>
    tpu.vector_store %arg10[%c0_8, %c0_9, %c0_10], %11 {strides = array<i32>} : memref<18x18x8xf32, #tpu.memory_space<vmem>>, vector<18x18x8xf32>,
    %13 = vector.shape_cast %10 : vector<256x8xf32> to vector<16x16x8xf32>
    %c1 = arith.constant 1 : index
    %c1_11 = arith.constant 1 : index
    %c0_12 = arith.constant 0 : index
    %14 = vector.load %arg10[%c1, %c1_11, %c0_12] : memref<18x18x8xf32, #tpu.memory_space<vmem>>, vector<16x16x8xf32>
    tpu.vector_store %arg10[%c1, %c1_11, %c0_12], %13 {strides = array<i32>} : memref<18x18x8xf32, #tpu.memory_space<vmem>>, vector<16x16x8xf32>,
    %c0_13 = arith.constant 0 : index
    %c0_14 = arith.constant 0 : index
    %c0_15 = arith.constant 0 : index
    %15 = vector.load %arg10[%c0_13, %c0_14, %c0_15] : memref<18x18x8xf32, #tpu.memory_space<vmem>>, vector<16x16x8xf32>
    %c0_16 = arith.constant 0 : index
    %c1_17 = arith.constant 1 : index
    %c0_18 = arith.constant 0 : index
    %16 = vector.load %arg10[%c0_16, %c1_17, %c0_18] : memref<18x18x8xf32, #tpu.memory_space<vmem>>, vector<16x16x8xf32>
    %c0_19 = arith.constant 0 : index
    %c2 = arith.constant 2 : index
    %c0_20 = arith.constant 0 : index
    %17 = vector.load %arg10[%c0_19, %c2, %c0_20] : memref<18x18x8xf32, #tpu.memory_space<vmem>>, vector<16x16x8xf32>
    %c1_21 = arith.constant 1 : index
    %c0_22 = arith.constant 0 : index
    %c0_23 = arith.constant 0 : index
    %18 = vector.load %arg10[%c1_21, %c0_22, %c0_23] : memref<18x18x8xf32, #tpu.memory_space<vmem>>, vector<16x16x8xf32>
    %c1_24 = arith.constant 1 : index
    %c1_25 = arith.constant 1 : index
    %c0_26 = arith.constant 0 : index
    %19 = vector.load %arg10[%c1_24, %c1_25, %c0_26] : memref<18x18x8xf32, #tpu.memory_space<vmem>>, vector<16x16x8xf32>
    %c1_27 = arith.constant 1 : index
    %c2_28 = arith.constant 2 : index
    %c0_29 = arith.constant 0 : index
    %20 = vector.load %arg10[%c1_27, %c2_28, %c0_29] : memref<18x18x8xf32, #tpu.memory_space<vmem>>, vector<16x16x8xf32>
    %c2_30 = arith.constant 2 : index
    %c0_31 = arith.constant 0 : index
    %c0_32 = arith.constant 0 : index
    %21 = vector.load %arg10[%c2_30, %c0_31, %c0_32] : memref<18x18x8xf32, #tpu.memory_space<vmem>>, vector<16x16x8xf32>
    %c2_33 = arith.constant 2 : index
    %c1_34 = arith.constant 1 : index
    %c0_35 = arith.constant 0 : index
    %22 = vector.load %arg10[%c2_33, %c1_34, %c0_35] : memref<18x18x8xf32, #tpu.memory_space<vmem>>, vector<16x16x8xf32>
    %c2_36 = arith.constant 2 : index
    %c2_37 = arith.constant 2 : index
    %c0_38 = arith.constant 0 : index
    %23 = vector.load %arg10[%c2_36, %c2_37, %c0_38] : memref<18x18x8xf32, #tpu.memory_space<vmem>>, vector<16x16x8xf32>
    %24 = tpu.concatenate %15, %16, %17, %18, %19, %20, %21, %22, %23 in 2 : vector<16x16x8xf32>, vector<16x16x8xf32>, vector<16x16x8xf32>, vector<16x16x8xf32>, vector<16x16x8xf32>, vector<16x16x8xf32>, vector<16x16x8xf32>, vector<16x16x8xf32>, vector<16x16x8xf32> -> vector<16x16x72xf32>
    %25 = vector.shape_cast %24 : vector<16x16x72xf32> to vector<256x72xf32>
    %26 = arith.truncf %25 : vector<256x72xf32> to vector<256x72xbf16>
    %c0_39 = arith.constant 0 : index
    %c0_40 = arith.constant 0 : index
    %27 = vector.load %arg4[%c0_39, %c0_40] : memref<72x8xbf16, #tpu.memory_space<vmem>>, vector<72x8xbf16>
    %cst_41 = arith.constant dense<0.000000e+00> : vector<256x8xf32>
    %28 = tpu.matmul %26, %27, %cst_41 {dimension_numbers = #tpu.dot_dimension_numbers<[1], [0], [0], [1], [0, 0, 1, 1], [], []>} : vector<256x72xbf16>, vector<72x8xbf16>, vector<256x8xf32> -> vector<256x8xf32>
    %c0_42 = arith.constant 0 : index
    %c0_43 = arith.constant 0 : index
    %29 = vector.load %arg5[%c0_42, %c0_43] : memref<1x8xf32, #tpu.memory_space<vmem>>, vector<1x8xf32>
    %30 = vector.broadcast %29 : vector<1x8xf32> to vector<256x8xf32>
    %31 = arith.addf %28, %30 : vector<256x8xf32>
    %cst_44 = arith.constant 0.000000e+00 : f32
    %32 = vector.broadcast %cst_44 : f32 to vector<256x8xf32>
    %33 = arith.maximumf %31, %32 : vector<256x8xf32>
    %34 = arith.truncf %33 : vector<256x8xf32> to vector<256x8xbf16>
    %c0_45 = arith.constant 0 : index
    %c0_46 = arith.constant 0 : index
    %35 = vector.load %arg6[%c0_45, %c0_46] : memref<8x8xbf16, #tpu.memory_space<vmem>>, vector<8x8xbf16>
    %cst_47 = arith.constant dense<0.000000e+00> : vector<256x8xf32>
    %36 = tpu.matmul %34, %35, %cst_47 {dimension_numbers = #tpu.dot_dimension_numbers<[1], [0], [0], [1], [0, 0, 1, 1], [], []>} : vector<256x8xbf16>, vector<8x8xbf16>, vector<256x8xf32> -> vector<256x8xf32>
    %c0_48 = arith.constant 0 : index
    %c0_49 = arith.constant 0 : index
    %37 = vector.load %arg7[%c0_48, %c0_49] : memref<4x8xbf16, #tpu.memory_space<vmem>>, vector<4x8xbf16>
    %cst_50 = arith.constant dense<0.000000e+00> : vector<256x8xf32>
    %38 = tpu.matmul %3, %37, %cst_50 {dimension_numbers = #tpu.dot_dimension_numbers<[1], [0], [0], [1], [0, 0, 1, 1], [], []>} : vector<256x4xbf16>, vector<4x8xbf16>, vector<256x8xf32> -> vector<256x8xf32>
    %c0_51 = arith.constant 0 : index
    %c0_52 = arith.constant 0 : index
    %39 = vector.load %arg8[%c0_51, %c0_52] : memref<1x8xf32, #tpu.memory_space<vmem>>, vector<1x8xf32>
    %40 = vector.broadcast %39 : vector<1x8xf32> to vector<256x8xf32>
    %41 = arith.addf %38, %40 : vector<256x8xf32>
    %42 = arith.addf %36, %41 : vector<256x8xf32>
    %cst_53 = arith.constant 0.000000e+00 : f32
    %43 = vector.broadcast %cst_53 : f32 to vector<256x8xf32>
    %44 = arith.maximumf %42, %43 : vector<256x8xf32>
    %45 = tpu.transpose %44, [1, 0] : vector<256x8xf32> -> vector<8x256xf32>
    %c0_54 = arith.constant 0 : index
    %c0_55 = arith.constant 0 : index
    %c0_56 = arith.constant 0 : index
    %46 = vector.load %arg9[%c0_54, %c0_55, %c0_56] : memref<1x8x256xf32, #tpu.memory_space<vmem>>, vector<1x8x256xf32>
    %47 = vector.shape_cast %46 : vector<1x8x256xf32> to vector<8x256xf32>
    %48 = vector.shape_cast %45 : vector<8x256xf32> to vector<1x8x256xf32>
    tpu.vector_store %arg9[%c0_54, %c0_55, %c0_56], %48 {strides = array<i32>} : memref<1x8x256xf32, #tpu.memory_space<vmem>>, vector<1x8x256xf32>,
    return
  }
  func.func @transform_0(%arg0: i32) -> (i32, i32, i32) {
    %c0_i32 = arith.constant 0 : i32
    %c0_i32_0 = arith.constant 0 : i32
    %c0_i32_1 = arith.constant 0 : i32
    return %arg0, %c0_i32, %c0_i32_0 : i32, i32, i32
  }
  func.func @transform_1(%arg0: i32) -> (i32, i32) {
    %c0_i32 = arith.constant 0 : i32
    %c0_i32_0 = arith.constant 0 : i32
    %c0_i32_1 = arith.constant 0 : i32
    return %c0_i32, %c0_i32_0 : i32, i32
  }
  func.func @transform_2(%arg0: i32) -> (i32, i32) {
    %c0_i32 = arith.constant 0 : i32
    %c0_i32_0 = arith.constant 0 : i32
    %c0_i32_1 = arith.constant 0 : i32
    return %c0_i32, %c0_i32_0 : i32, i32
  }
  func.func @transform_3(%arg0: i32) -> (i32, i32) {
    %c0_i32 = arith.constant 0 : i32
    %c0_i32_0 = arith.constant 0 : i32
    %c0_i32_1 = arith.constant 0 : i32
    return %c0_i32, %c0_i32_0 : i32, i32
  }
  func.func @transform_4(%arg0: i32) -> (i32, i32) {
    %c0_i32 = arith.constant 0 : i32
    %c0_i32_0 = arith.constant 0 : i32
    %c0_i32_1 = arith.constant 0 : i32
    return %c0_i32, %c0_i32_0 : i32, i32
  }
  func.func @transform_5(%arg0: i32) -> (i32, i32) {
    %c0_i32 = arith.constant 0 : i32
    %c0_i32_0 = arith.constant 0 : i32
    %c0_i32_1 = arith.constant 0 : i32
    return %c0_i32, %c0_i32_0 : i32, i32
  }
  func.func @transform_6(%arg0: i32) -> (i32, i32) {
    %c0_i32 = arith.constant 0 : i32
    %c0_i32_0 = arith.constant 0 : i32
    %c0_i32_1 = arith.constant 0 : i32
    return %c0_i32, %c0_i32_0 : i32, i32
  }
  func.func @transform_7(%arg0: i32) -> (i32, i32) {
    %c0_i32 = arith.constant 0 : i32
    %c0_i32_0 = arith.constant 0 : i32
    %c0_i32_1 = arith.constant 0 : i32
    return %c0_i32, %c0_i32_0 : i32, i32
  }
  func.func @transform_8(%arg0: i32) -> (i32, i32, i32) {
    %c0_i32 = arith.constant 0 : i32
    %c0_i32_0 = arith.constant 0 : i32
    %c0_i32_1 = arith.constant 0 : i32
    return %arg0, %c0_i32, %c0_i32_0 : i32, i32, i32
  }
}

</mosaic_0001>

<llo_original>
// kernel: bottleneck_forward.1
$region0: #{bottleneck_forward.1}
  #allocation0 [shape = 'u32[]', space=smem, size = 0x4, offset = 0x4, fixed_abs, tag = 'smem constant byte address 0x4 - core index']
  #allocation1 [shape = 'u32[72,128]{1,0:T(1,128)}', space=vmem, size = 0x9000, scoped, tag = 'internal scratch']
  #allocation2 [shape = 'f32[18,18,8]{2,1,0:T(8,128)}', space=vmem, size = 0x36000, scoped, tag = 'scratch operand']
  %s0 = inlined_call_operand.vmem [shape: f32[2,4,256], index: 0, kind: input, shape index: {}]
  %s1 = inlined_call_operand.vmem [shape: bf16[4,8], index: 1, kind: input, shape index: {}]
  %s2 = inlined_call_operand.vmem [shape: f32[1,8], index: 2, kind: input, shape index: {}]
  %s3 = inlined_call_operand.vmem [shape: bf16[72,8], index: 3, kind: input, shape index: {}]
  %s4 = inlined_call_operand.vmem [shape: f32[1,8], index: 4, kind: input, shape index: {}]
  %s5 = inlined_call_operand.vmem [shape: bf16[8,8], index: 5, kind: input, shape index: {}]
  %s6 = inlined_call_operand.vmem [shape: bf16[4,8], index: 6, kind: input, shape index: {}]
  %s7 = inlined_call_operand.vmem [shape: f32[1,8], index: 7, kind: input, shape index: {}]
  %s8 = inlined_call_operand.vmem [shape: f32[2,8,256], index: 8, kind: output, shape index: {}]
  %s9 = sld [smem:[#allocation0]]
  $region65: #{bottleneck_forward.1} parent=0
    _
  %s11 = ssub.s32 1, %s9
  %s12 = scalar_select 0, %s11, %s9
  loop: start=0, step=1, limit=4
  $region2: #{bottleneck_forward.1} parent=0 // loop_pre_header
    _
  $region3: #{bottleneck_forward.1} parent=0 // loop_header
    %s14 = sphi 0, %s18
    %p15 = scmp.ge.s32.totalorder %s14, 4
    %s24 = sphi 0, %s26
    %s27 = sphi 0, %s24
    %s28 = sphi 0, %s27
    %s44 = sphi 0, %s28
    %s48 = sphi 0, %s48
    %s50 = sphi 0, %s48
    %s51 = sphi 0, %s50
    %s65 = sphi 0, %s51
    %s69 = sphi 0, %s69
    %s71 = sphi 0, %s69
    %s72 = sphi 0, %s71
    %s86 = sphi 0, %s72
    %s90 = sphi 0, %s90
    %s92 = sphi 0, %s90
    %s93 = sphi 0, %s92
    %s107 = sphi 0, %s93
    %s111 = sphi 0, %s111
    %s113 = sphi 0, %s111
    %s114 = sphi 0, %s113
    %s128 = sphi 0, %s114
    %s132 = sphi 0, %s132
    %s134 = sphi 0, %s132
    %s135 = sphi 0, %s134
    %s149 = sphi 0, %s135
    %s153 = sphi 0, %s153
    %s155 = sphi 0, %s153
    %s156 = sphi 0, %s155
    %s170 = sphi 0, %s156
    %s174 = sphi 0, %s174
    %s176 = sphi 0, %s174
    %s177 = sphi 0, %s176
    %s191 = sphi 0, %s177
    %s197 = sphi 0, %s199
    %s200 = sphi 0, %s197
    %s201 = sphi 0, %s200
    %s217 = sphi 0, %s201
  $region4: #{bottleneck_forward.1} parent=0 // loop_header_branch
    %17 = sbr.rel (%p15) target = $region8
  $region5: #{bottleneck_forward.1} parent=0 // loop_body
    %s19 = ssub.s32 %s14, 1
    %s20 = ssub.s32 %s14, 2
    %s21 = sadd.s32 %s14, 1
    %s22 = ssub.s32 %s14, %s21
    %p23 = scmp.eq.s32.totalorder %s22, 0
    %s25 = sadd.s32 %s24, 1
    %s26 = scalar_select %p23, %s24, %s25
    %p29 = pneg %p23
    %p30 = scmp.eq.s32.totalorder %s14, 1
    %p31 = por %p29, %p30
    %p32 = scmp.ne.s32.totalorder %s24, %s27
    %p33 = scmp.eq.s32.totalorder %s14, 0
    %p34 = por %p32, %p33
    %p35 = scmp.ne.s32.totalorder %s24, %s27
    %p36 = scmp.eq.s32.totalorder %s19, 1
    %p37 = por %p35, %p36
    %p38 = scmp.ne.s32.totalorder %s27, %s28
    %p39 = scmp.eq.s32.totalorder %s19, 0
    %p40 = por %p38, %p39
    %p41 = scmp.ne.s32.totalorder %s27, %s28
    %p42 = scmp.eq.s32.totalorder %s20, 1
    %p43 = por %p41, %p42
    %p45 = scmp.ne.s32.totalorder %s28, %s44
    %p46 = scmp.eq.s32.totalorder %s20, 0
    %p47 = por %p45, %p46
    %s49 = sadd.s32 %s48, 1
    %p52 = scmp.eq.s32.totalorder %s14, 1
    %p53 = scmp.ne.s32.totalorder %s48, %s50
    %p54 = scmp.eq.s32.totalorder %s14, 0
    %p55 = por %p53, %p54
    %p56 = scmp.ne.s32.totalorder %s48, %s50
    %p57 = scmp.eq.s32.totalorder %s19, 1
    %p58 = por %p56, %p57
    %p59 = scmp.ne.s32.totalorder %s50, %s51
    %p60 = scmp.eq.s32.totalorder %s19, 0
    %p61 = por %p59, %p60
    %p62 = scmp.ne.s32.totalorder %s50, %s51
    %p63 = scmp.eq.s32.totalorder %s20, 1
    %p64 = por %p62, %p63
    %p66 = scmp.ne.s32.totalorder %s51, %s65
    %p67 = scmp.eq.s32.totalorder %s20, 0
    %p68 = por %p66, %p67
    %s70 = sadd.s32 %s69, 1
    %p73 = scmp.eq.s32.totalorder %s14, 1
    %p74 = scmp.ne.s32.totalorder %s69, %s71
    %p75 = scmp.eq.s32.totalorder %s14, 0
    %p76 = por %p74, %p75
    %p77 = scmp.ne.s32.totalorder %s69, %s71
    %p78 = scmp.eq.s32.totalorder %s19, 1
    %p79 = por %p77, %p78
    %p80 = scmp.ne.s32.totalorder %s71, %s72
    %p81 = scmp.eq.s32.totalorder %s19, 0
    %p82 = por %p80, %p81
    %p83 = scmp.ne.s32.totalorder %s71, %s72
    %p84 = scmp.eq.s32.totalorder %s20, 1
    %p85 = por %p83, %p84
    %p87 = scmp.ne.s32.totalorder %s72, %s86
    %p88 = scmp.eq.s32.totalorder %s20, 0
    %p89 = por %p87, %p88
    %s91 = sadd.s32 %s90, 1
    %p94 = scmp.eq.s32.totalorder %s14, 1
    %p95 = scmp.ne.s32.totalorder %s90, %s92
    %p96 = scmp.eq.s32.totalorder %s14, 0
    %p97 = por %p95, %p96
    %p98 = scmp.ne.s32.totalorder %s90, %s92
    %p99 = scmp.eq.s32.totalorder %s19, 1
    %p100 = por %p98, %p99
    %p101 = scmp.ne.s32.totalorder %s92, %s93
    %p102 = scmp.eq.s32.totalorder %s19, 0
    %p103 = por %p101, %p102
    %p104 = scmp.ne.s32.totalorder %s92, %s93
    %p105 = scmp.eq.s32.totalorder %s20, 1
    %p106 = por %p104, %p105
    %p108 = scmp.ne.s32.totalorder %s93, %s107
    %p109 = scmp.eq.s32.totalorder %s20, 0
    %p110 = por %p108, %p109
    %s112 = sadd.s32 %s111, 1
    %p115 = scmp.eq.s32.totalorder %s14, 1
    %p116 = scmp.ne.s32.totalorder %s111, %s113
    %p117 = scmp.eq.s32.totalorder %s14, 0
    %p118 = por %p116, %p117
    %p119 = scmp.ne.s32.totalorder %s111, %s113
    %p120 = scmp.eq.s32.totalorder %s19, 1
    %p121 = por %p119, %p120
    %p122 = scmp.ne.s32.totalorder %s113, %s114
    %p123 = scmp.eq.s32.totalorder %s19, 0
    %p124 = por %p122, %p123
    %p125 = scmp.ne.s32.totalorder %s113, %s114
    %p126 = scmp.eq.s32.totalorder %s20, 1
    %p127 = por %p125, %p126
    %p129 = scmp.ne.s32.totalorder %s114, %s128
    %p130 = scmp.eq.s32.totalorder %s20, 0
    %p131 = por %p129, %p130
    %s133 = sadd.s32 %s132, 1
    %p136 = scmp.eq.s32.totalorder %s14, 1
    %p137 = scmp.ne.s32.totalorder %s132, %s134
    %p138 = scmp.eq.s32.totalorder %s14, 0
    %p139 = por %p137, %p138
    %p140 = scmp.ne.s32.totalorder %s132, %s134
    %p141 = scmp.eq.s32.totalorder %s19, 1
    %p142 = por %p140, %p141
    %p143 = scmp.ne.s32.totalorder %s134, %s135
    %p144 = scmp.eq.s32.totalorder %s19, 0
    %p145 = por %p143, %p144
    %p146 = scmp.ne.s32.totalorder %s134, %s135
    %p147 = scmp.eq.s32.totalorder %s20, 1
    %p148 = por %p146, %p147
    %p150 = scmp.ne.s32.totalorder %s135, %s149
    %p151 = scmp.eq.s32.totalorder %s20, 0
    %p152 = por %p150, %p151
    %s154 = sadd.s32 %s153, 1
    %p157 = scmp.eq.s32.totalorder %s14, 1
    %p158 = scmp.ne.s32.totalorder %s153, %s155
    %p159 = scmp.eq.s32.totalorder %s14, 0
    %p160 = por %p158, %p159
    %p161 = scmp.ne.s32.totalorder %s153, %s155
    %p162 = scmp.eq.s32.totalorder %s19, 1
    %p163 = por %p161, %p162
    %p164 = scmp.ne.s32.totalorder %s155, %s156
    %p165 = scmp.eq.s32.totalorder %s19, 0
    %p166 = por %p164, %p165
    %p167 = scmp.ne.s32.totalorder %s155, %s156
    %p168 = scmp.eq.s32.totalorder %s20, 1
    %p169 = por %p167, %p168
    %p171 = scmp.ne.s32.totalorder %s156, %s170
    %p172 = scmp.eq.s32.totalorder %s20, 0
    %p173 = por %p171, %p172
    %s175 = sadd.s32 %s174, 1
    %p178 = scmp.eq.s32.totalorder %s14, 1
    %p179 = scmp.ne.s32.totalorder %s174, %s176
    %p180 = scmp.eq.s32.totalorder %s14, 0
    %p181 = por %p179, %p180
    %p182 = scmp.ne.s32.totalorder %s174, %s176
    %p183 = scmp.eq.s32.totalorder %s19, 1
    %p184 = por %p182, %p183
    %p185 = scmp.ne.s32.totalorder %s176, %s177
    %p186 = scmp.eq.s32.totalorder %s19, 0
    %p187 = por %p185, %p186
    %p188 = scmp.ne.s32.totalorder %s176, %s177
    %p189 = scmp.eq.s32.totalorder %s20, 1
    %p190 = por %p188, %p189
    %p192 = scmp.ne.s32.totalorder %s177, %s191
    %p193 = scmp.eq.s32.totalorder %s20, 0
    %p194 = por %p192, %p193
    %s195 = ssub.s32 %s14, %s21
    %p196 = scmp.eq.s32.totalorder %s195, 0
    %s198 = sadd.s32 %s197, 1
    %s199 = scalar_select %p196, %s197, %s198
    %p202 = pneg %p196
    %p203 = scmp.eq.s32.totalorder %s14, 1
    %p204 = por %p202, %p203
    %p205 = scmp.ne.s32.totalorder %s197, %s200
    %p206 = scmp.eq.s32.totalorder %s14, 0
    %p207 = por %p205, %p206
    %p208 = scmp.ne.s32.totalorder %s197, %s200
    %p209 = scmp.eq.s32.totalorder %s19, 1
    %p210 = por %p208, %p209
    %p211 = scmp.ne.s32.totalorder %s200, %s201
    %p212 = scmp.eq.s32.totalorder %s19, 0
    %p213 = por %p211, %p212
    %p214 = scmp.ne.s32.totalorder %s200, %s201
    %p215 = scmp.eq.s32.totalorder %s20, 1
    %p216 = por %p214, %p215
    %p218 = scmp.ne.s32.totalorder %s201, %s217
    %p219 = scmp.eq.s32.totalorder %s20, 0
    %p220 = por %p218, %p219
    %p221 = scmp.le.s32.totalorder 1, %s14
    %p222 = scmp.lt.s32.totalorder %s14, 3
    %p223 = pnand %p221, %p222
    %p224 = pneg %p223
    // Predicated region
    $region9: #{bottleneck_forward.1} parent=5 // pred_check
      _
    $region10: #{bottleneck_forward.1} parent=5 // pred_check_branch
      %226 = sbr.rel (%p223) target = $region12
    $region11: #{bottleneck_forward.1} parent=5 // pred_region
      %s227 = ssub.s32 %s14, 1
      // Predicated region
      $region13: #{bottleneck_forward.1} parent=11 // pred_check
        %p228 = pneg %p61
      $region14: #{bottleneck_forward.1} parent=11 // pred_check_branch
        %230 = sbr.rel (%p228) target = $region16
      $region15: #{bottleneck_forward.1} parent=11 // pred_region
        _
      $region16: #{bottleneck_forward.1} parent=11 // pred_fallthru
        _
      // Predicated region
      $region17: #{bottleneck_forward.1} parent=11 // pred_check
        %p231 = pneg %p82
      $region18: #{bottleneck_forward.1} parent=11 // pred_check_branch
        %233 = sbr.rel (%p231) target = $region20
      $region19: #{bottleneck_forward.1} parent=11 // pred_region
        _
      $region20: #{bottleneck_forward.1} parent=11 // pred_fallthru
        _
      // Predicated region
      $region21: #{bottleneck_forward.1} parent=11 // pred_check
        %p234 = pneg %p103
      $region22: #{bottleneck_forward.1} parent=11 // pred_check_branch
        %236 = sbr.rel (%p234) target = $region24
      $region23: #{bottleneck_forward.1} parent=11 // pred_region
        _
      $region24: #{bottleneck_forward.1} parent=11 // pred_fallthru
        _
      // Predicated region
      $region25: #{bottleneck_forward.1} parent=11 // pred_check
        %p237 = pneg %p124
      $region26: #{bottleneck_forward.1} parent=11 // pred_check_branch
        %239 = sbr.rel (%p237) target = $region28
      $region27: #{bottleneck_forward.1} parent=11 // pred_region
        _
      $region28: #{bottleneck_forward.1} parent=11 // pred_fallthru
        _
      // Predicated region
      $region29: #{bottleneck_forward.1} parent=11 // pred_check
        %p240 = pneg %p145
      $region30: #{bottleneck_forward.1} parent=11 // pred_check_branch
        %242 = sbr.rel (%p240) target = $region32
      $region31: #{bottleneck_forward.1} parent=11 // pred_region
        _
      $region32: #{bottleneck_forward.1} parent=11 // pred_fallthru
        _
      // Predicated region
      $region33: #{bottleneck_forward.1} parent=11 // pred_check
        %p243 = pneg %p166
      $region34: #{bottleneck_forward.1} parent=11 // pred_check_branch
        %245 = sbr.rel (%p243) target = $region36
      $region35: #{bottleneck_forward.1} parent=11 // pred_region
        _
      $region36: #{bottleneck_forward.1} parent=11 // pred_fallthru
        _
      // Predicated region
      $region37: #{bottleneck_forward.1} parent=11 // pred_check
        %p246 = pneg %p187
      $region38: #{bottleneck_forward.1} parent=11 // pred_check_branch
        %248 = sbr.rel (%p246) target = $region40
      $region39: #{bottleneck_forward.1} parent=11 // pred_region
        _
      $region40: #{bottleneck_forward.1} parent=11 // pred_fallthru
        _
    $region12: #{bottleneck_forward.1} parent=5 // pred_fallthru
      _
    %p249 = scmp.lt.s32.totalorder %s14, 2
    // Predicated region
    $region41: #{bottleneck_forward.1} parent=5 // pred_check
      %p250 = pneg %p249
    $region42: #{bottleneck_forward.1} parent=5 // pred_check_branch
      %252 = sbr.rel (%p250) target = $region44
    $region43: #{bottleneck_forward.1} parent=5 // pred_region
      // Predicated region
      $region45: #{bottleneck_forward.1} parent=43 // pred_check
        %p253 = pneg %p34
      $region46: #{bottleneck_forward.1} parent=43 // pred_check_branch
        %255 = sbr.rel (%p253) target = $region48
      $region47: #{bottleneck_forward.1} parent=43 // pred_region
        %p256 = scmp.lt.s32.totalorder %s14, 1
        %s257 = scalar_select %p256, %s14, 1
        %s258 = smul.addr %s257, 2
        %s259 = smul.addr %s258, 4
        %s260 = scalar_lea.vmem %s0, %s259
      $region48: #{bottleneck_forward.1} parent=43 // pred_fallthru
        _
    $region44: #{bottleneck_forward.1} parent=5 // pred_fallthru
      _
    %p261 = scmp.le.s32.totalorder 1, %s14
    %p262 = scmp.lt.s32.totalorder %s14, 3
    %p263 = pnand %p261, %p262
    %p264 = pneg %p263
    // Predicated region
    $region49: #{bottleneck_forward.1} parent=5 // pred_check
      _
    $region50: #{bottleneck_forward.1} parent=5 // pred_check_branch
      %266 = sbr.rel (%p263) target = $region52
    $region51: #{bottleneck_forward.1} parent=5 // pred_region
      %s267 = ssub.s32 %s14, 1
      %p268 = scmp.lt.s32.totalorder %s19, 1
      %s269 = scalar_select %p268, %s19, 1
      %s270 = smul.addr %s269, 2
      %s271 = smul.addr %s270, 4
      %s272 = scalar_lea.vmem %s0, %s271
      %p273 = pneg %p40
      %p274 = pneg %p37
      %p275 = pneg %p61
      %p276 = pneg %p58
      %p277 = pneg %p82
      %p278 = pneg %p79
      %p279 = pneg %p103
      %p280 = pneg %p100
      %p281 = pneg %p124
      %p282 = pneg %p121
      %p283 = pneg %p145
      %p284 = pneg %p142
      %p285 = pneg %p166
      %p286 = pneg %p163
      %p287 = pneg %p187
      %p288 = pneg %p184
      %p289 = pneg %p213
      %p290 = pneg %p210
      %p291 = scmp.lt.s32.totalorder %s19, 1
      %s292 = scalar_select %p291, %s19, 1
      %s293 = smul.addr %s292, 2
      %s294 = smul.addr %s293, 8
      %s295 = scalar_lea.vmem %s8, %s294
      %p296 = scmp.lt.s32.totalorder %s19, 1
      %s297 = scalar_select %p296, %s19, 1
      %s298 = smul.addr %s297, 2
      %s299 = smul.addr %s298, 4
      %s300 = scalar_lea.vmem %s0, %s299
      %p301 = scmp.lt.s32.totalorder %s19, 1
      %s302 = scalar_select %p301, %s19, 1
      %s303 = smul.addr %s302, 2
      %s304 = smul.addr %s303, 8
      %s305 = scalar_lea.vmem %s8, %s304
      %v307 = vld [vmem:[%s300] sm:$0xff]
      %309 = vst [vmem:[#allocation1] ss:$2 sm:$0xff] %v307
      %v310 = vld.sshfl [vmem:[#allocation1] sm:$0xff pattern:$0x75316420]
      %v311 = vld.sshfl [vmem:[#allocation1 + $0x8] sm:$0xff pattern:$0x75316420]
      %314 = vxpose.xlu0.b32.start [1/16] %v310, 128
      %315 = vxpose.xlu0.b32.cont [2/16] 0.0, 128
      %316 = vxpose.xlu0.b32.cont [3/16] 0.0, 128
      %317 = vxpose.xlu0.b32.cont [4/16] 0.0, 128
      %318 = vxpose.xlu0.b32.cont [5/16] 0.0, 128
      %319 = vxpose.xlu0.b32.cont [6/16] 0.0, 128
      %320 = vxpose.xlu0.b32.cont [7/16] 0.0, 128
      %321 = vxpose.xlu0.b32.cont [8/16] 0.0, 128
      %322 = vxpose.xlu0.b32.cont [9/16] 0.0, 128
      %323 = vxpose.xlu0.b32.cont [10/16] 0.0, 128
      %324 = vxpose.xlu0.b32.cont [11/16] 0.0, 128
      %325 = vxpose.xlu0.b32.cont [12/16] 0.0, 128
      %326 = vxpose.xlu0.b32.cont [13/16] 0.0, 128
      %327 = vxpose.xlu0.b32.cont [14/16] 0.0, 128
      %328 = vxpose.xlu0.b32.cont [15/16] 0.0, 128
      %329 = vxpose.xlu0.b32.end [16/16] 0.0, 128
      %v330 = vpop.trf.xlu0
      %v331 = vpop.trf.xlu0
      %v332 = vpop.trf.xlu0
      %v333 = vpop.trf.xlu0
      %v334 = vpop.trf.xlu0
      %v335 = vpop.trf.xlu0
      %v336 = vpop.trf.xlu0
      %v337 = vpop.trf.xlu0
      %v338 = vpop.trf.xlu0
      %v339 = vpop.trf.xlu0
      %v340 = vpop.trf.xlu0
      %v341 = vpop.trf.xlu0
      %v342 = vpop.trf.xlu0
      %v343 = vpop.trf.xlu0
      %v344 = vpop.trf.xlu0
      %v345 = vpop.trf.xlu0
      %346 = vxpose.xlu0.b32.start [1/16] %v311, 128
      %347 = vxpose.xlu0.b32.cont [2/16] 0.0, 128
      %348 = vxpose.xlu0.b32.cont [3/16] 0.0, 128
      %349 = vxpose.xlu0.b32.cont [4/16] 0.0, 128
      %350 = vxpose.xlu0.b32.cont [5/16] 0.0, 128
      %351 = vxpose.xlu0.b32.cont [6/16] 0.0, 128
      %352 = vxpose.xlu0.b32.cont [7/16] 0.0, 128
      %353 = vxpose.xlu0.b32.cont [8/16] 0.0, 128
      %354 = vxpose.xlu0.b32.cont [9/16] 0.0, 128
      %355 = vxpose.xlu0.b32.cont [10/16] 0.0, 128
      %356 = vxpose.xlu0.b32.cont [11/16] 0.0, 128
      %357 = vxpose.xlu0.b32.cont [12/16] 0.0, 128
      %358 = vxpose.xlu0.b32.cont [13/16] 0.0, 128
      %359 = vxpose.xlu0.b32.cont [14/16] 0.0, 128
      %360 = vxpose.xlu0.b32.cont [15/16] 0.0, 128
      %361 = vxpose.xlu0.b32.end [16/16] 0.0, 128
      %v362 = vpop.trf.xlu0
      %v363 = vpop.trf.xlu0
      %v364 = vpop.trf.xlu0
      %v365 = vpop.trf.xlu0
      %v366 = vpop.trf.xlu0
      %v367 = vpop.trf.xlu0
      %v368 = vpop.trf.xlu0
      %v369 = vpop.trf.xlu0
      %v370 = vpop.trf.xlu0
      %v371 = vpop.trf.xlu0
      %v372 = vpop.trf.xlu0
      %v373 = vpop.trf.xlu0
      %v374 = vpop.trf.xlu0
      %v375 = vpop.trf.xlu0
      %v376 = vpop.trf.xlu0
      %v377 = vpop.trf.xlu0
      %v378 = vpack.c.bf16 %v331, %v330
      %v379 = vpack.c.bf16 %v333, %v332
      %v380 = vpack.c.bf16 %v335, %v334
      %v381 = vpack.c.bf16 %v337, %v336
      %v382 = vpack.c.bf16 %v339, %v338
      %v383 = vpack.c.bf16 %v341, %v340
      %v384 = vpack.c.bf16 %v343, %v342
      %v385 = vpack.c.bf16 %v345, %v344
      %v386 = vpack.c.bf16 %v363, %v362
      %v387 = vpack.c.bf16 %v365, %v364
      %v388 = vpack.c.bf16 %v367, %v366
      %v389 = vpack.c.bf16 %v369, %v368
      %v390 = vpack.c.bf16 %v371, %v370
      %v391 = vpack.c.bf16 %v373, %v372
      %v392 = vpack.c.bf16 %v375, %v374
      %v393 = vpack.c.bf16 %v377, %v376
      %v394 = vld [vmem:[%s1] sm:$0x3]
      %v395 = vld [vmem:[%s2] sm:$0x1]
      %v397 = vperm.slane %v395, 0
      %vm399 = vcmask 31744
      %v401 = vsel %vm399, %v378, 0
      %v404 = vsel %vm399, %v379, 0
      %v407 = vsel %vm399, %v380, 0
      %v410 = vsel %vm399, %v381, 0
      %v413 = vsel %vm399, %v382, 0
      %v416 = vsel %vm399, %v383, 0
      %v419 = vsel %vm399, %v384, 0
      %v422 = vsel %vm399, %v385, 0
      %v425 = vsel %vm399, %v386, 0
      %v428 = vsel %vm399, %v387, 0
      %v431 = vsel %vm399, %v388, 0
      %v434 = vsel %vm399, %v389, 0
      %v437 = vsel %vm399, %v390, 0
      %v440 = vsel %vm399, %v391, 0
      %v443 = vsel %vm399, %v392, 0
      %v446 = vsel %vm399, %v393, 0
      %vm448 = vcmask 1041408
      %v450 = vsel %vm448, %v394, 0
      %452 = vmatpush.bf16.msra.mxu0 0
      %453 = vmatpush.bf16.msra.mxu0 0
      %454 = vmatpush.bf16.msra.mxu0 0
      %455 = vmatpush.bf16.msra.mxu0 0
      %456 = vmatpush.bf16.msra.mxu0 0
      %457 = vmatpush.bf16.msra.mxu0 0
      %458 = vmatpush.bf16.msra.mxu0 0
      %459 = vmatpush.bf16.msra.mxu0 %v450
      %460 = vmatmul.bf16.gmra.mxu0 %v401
      %v461 = vpop.f32.mrf.mxu0
      %v462 = vadd.f32 %v397, %v461
      %v463 = vpop.f32.mrf.mxu0
      %v464 = vadd.f32 %v397, %v463
      %465 = vmatmul.bf16.gmra.mxu0 %v404
      %v466 = vpop.f32.mrf.mxu0
      %v467 = vadd.f32 %v397, %v466
      %v468 = vpop.f32.mrf.mxu0
      %v469 = vadd.f32 %v397, %v468
      %470 = vmatmul.bf16.gmra.mxu0 %v407
      %v471 = vpop.f32.mrf.mxu0
      %v472 = vadd.f32 %v397, %v471
      %v473 = vpop.f32.mrf.mxu0
      %v474 = vadd.f32 %v397, %v473
      %475 = vmatmul.bf16.gmra.mxu0 %v410
      %v476 = vpop.f32.mrf.mxu0
      %v477 = vadd.f32 %v397, %v476
      %v478 = vpop.f32.mrf.mxu0
      %v479 = vadd.f32 %v397, %v478
      %480 = vmatmul.bf16.gmra.mxu0 %v413
      %v481 = vpop.f32.mrf.mxu0
      %v482 = vadd.f32 %v397, %v481
      %v483 = vpop.f32.mrf.mxu0
      %v484 = vadd.f32 %v397, %v483
      %485 = vmatmul.bf16.gmra.mxu0 %v416
      %v486 = vpop.f32.mrf.mxu0
      %v487 = vadd.f32 %v397, %v486
      %v488 = vpop.f32.mrf.mxu0
      %v489 = vadd.f32 %v397, %v488
      %490 = vmatmul.bf16.gmra.mxu0 %v419
      %v491 = vpop.f32.mrf.mxu0
      %v492 = vadd.f32 %v397, %v491
      %v493 = vpop.f32.mrf.mxu0
      %v494 = vadd.f32 %v397, %v493
      %495 = vmatmul.bf16.gmra.mxu0 %v422
      %v496 = vpop.f32.mrf.mxu0
      %v497 = vadd.f32 %v397, %v496
      %v498 = vpop.f32.mrf.mxu0
      %v499 = vadd.f32 %v397, %v498
      %500 = vmatmul.bf16.gmra.mxu0 %v425
      %v501 = vpop.f32.mrf.mxu0
      %v502 = vadd.f32 %v397, %v501
      %v503 = vpop.f32.mrf.mxu0
      %v504 = vadd.f32 %v397, %v503
      %505 = vmatmul.bf16.gmra.mxu0 %v428
      %v506 = vpop.f32.mrf.mxu0
      %v507 = vadd.f32 %v397, %v506
      %v508 = vpop.f32.mrf.mxu0
      %v509 = vadd.f32 %v397, %v508
      %510 = vmatmul.bf16.gmra.mxu0 %v431
      %v511 = vpop.f32.mrf.mxu0
      %v512 = vadd.f32 %v397, %v511
      %v513 = vpop.f32.mrf.mxu0
      %v514 = vadd.f32 %v397, %v513
      %515 = vmatmul.bf16.gmra.mxu0 %v434
      %v516 = vpop.f32.mrf.mxu0
      %v517 = vadd.f32 %v397, %v516
      %v518 = vpop.f32.mrf.mxu0
      %v519 = vadd.f32 %v397, %v518
      %520 = vmatmul.bf16.gmra.mxu0 %v437
      %v521 = vpop.f32.mrf.mxu0
      %v522 = vadd.f32 %v397, %v521
      %v523 = vpop.f32.mrf.mxu0
      %v524 = vadd.f32 %v397, %v523
      %525 = vmatmul.bf16.gmra.mxu0 %v440
      %v526 = vpop.f32.mrf.mxu0
      %v527 = vadd.f32 %v397, %v526
      %v528 = vpop.f32.mrf.mxu0
      %v529 = vadd.f32 %v397, %v528
      %530 = vmatmul.bf16.gmra.mxu0 %v443
      %v531 = vpop.f32.mrf.mxu0
      %v532 = vadd.f32 %v397, %v531
      %v533 = vpop.f32.mrf.mxu0
      %v534 = vadd.f32 %v397, %v533
      %535 = vmatmul.bf16.gmra.mxu0 %v446
      %v536 = vpop.f32.mrf.mxu0
      %v537 = vadd.f32 %v397, %v536
      %v538 = vpop.f32.mrf.mxu0
      %v539 = vadd.f32 %v397, %v538
      %540 = vdwg.mxu0
      %v541 = vmax.f32 %v462, 0.0
      %v542 = vmax.f32 %v464, 0.0
      %v543 = vmax.f32 %v467, 0.0
      %v544 = vmax.f32 %v469, 0.0
      %v545 = vmax.f32 %v472, 0.0
      %v546 = vmax.f32 %v474, 0.0
      %v547 = vmax.f32 %v477, 0.0
      %v548 = vmax.f32 %v479, 0.0
      %v549 = vmax.f32 %v482, 0.0
      %v550 = vmax.f32 %v484, 0.0
      %v551 = vmax.f32 %v487, 0.0
      %v552 = vmax.f32 %v489, 0.0
      %v553 = vmax.f32 %v492, 0.0
      %v554 = vmax.f32 %v494, 0.0
      %v555 = vmax.f32 %v497, 0.0
      %v556 = vmax.f32 %v499, 0.0
      %v557 = vmax.f32 %v502, 0.0
      %v558 = vmax.f32 %v504, 0.0
      %v559 = vmax.f32 %v507, 0.0
      %v560 = vmax.f32 %v509, 0.0
      %v561 = vmax.f32 %v512, 0.0
      %v562 = vmax.f32 %v514, 0.0
      %v563 = vmax.f32 %v517, 0.0
      %v564 = vmax.f32 %v519, 0.0
      %v565 = vmax.f32 %v522, 0.0
      %v566 = vmax.f32 %v524, 0.0
      %v567 = vmax.f32 %v527, 0.0
      %v568 = vmax.f32 %v529, 0.0
      %v569 = vmax.f32 %v532, 0.0
      %v570 = vmax.f32 %v534, 0.0
      %v571 = vmax.f32 %v537, 0.0
      %v572 = vmax.f32 %v539, 0.0
      %vm573 = vcmask 64512
      %574 = vst.msk [vmem:[#allocation2] sm:$0xff] %vm573, 0.0
      %575 = vst.msk [vmem:[#allocation2 + $0x8] sm:$0xff] %vm573, 0.0
      %vm576 = vcmask 58368
      %577 = vst.msk [vmem:[#allocation2 + $0x10] sm:$0x3] %vm576, 0.0
      %578 = vst.msk [vmem:[#allocation2 + $0x18] sm:$0xff] %vm573, 0.0
      %579 = vst.msk [vmem:[#allocation2 + $0x20] sm:$0xff] %vm573, 0.0
      %580 = vst.msk [vmem:[#allocation2 + $0x28] sm:$0x3] %vm576, 0.0
      %581 = vst.msk [vmem:[#allocation2 + $0x30] sm:$0xff] %vm573, 0.0
      %582 = vst.msk [vmem:[#allocation2 + $0x38] sm:$0xff] %vm573, 0.0
      %583 = vst.msk [vmem:[#allocation2 + $0x40] sm:$0x3] %vm576, 0.0
      %584 = vst.msk [vmem:[#allocation2 + $0x48] sm:$0xff] %vm573, 0.0
      %585 = vst.msk [vmem:[#allocation2 + $0x50] sm:$0xff] %vm573, 0.0
      %586 = vst.msk [vmem:[#allocation2 + $0x58] sm:$0x3] %vm576, 0.0
      %587 = vst.msk [vmem:[#allocation2 + $0x60] sm:$0xff] %vm573, 0.0
      %588 = vst.msk [vmem:[#allocation2 + $0x68] sm:$0xff] %vm573, 0.0
      %589 = vst.msk [vmem:[#allocation2 + $0x70] sm:$0x3] %vm576, 0.0
      %590 = vst.msk [vmem:[#allocation2 + $0x78] sm:$0xff] %vm573, 0.0
      %591 = vst.msk [vmem:[#allocation2 + $0x80] sm:$0xff] %vm573, 0.0
      %592 = vst.msk [vmem:[#allocation2 + $0x88] sm:$0x3] %vm576, 0.0
      %593 = vst.msk [vmem:[#allocation2 + $0x90] sm:$0xff] %vm573, 0.0
      %594 = vst.msk [vmem:[#allocation2 + $0x98] sm:$0xff] %vm573, 0.0
      %595 = vst.msk [vmem:[#allocation2 + $0xa0] sm:$0x3] %vm576, 0.0
      %596 = vst.msk [vmem:[#allocation2 + $0xa8] sm:$0xff] %vm573, 0.0
      %597 = vst.msk [vmem:[#allocation2 + $0xb0] sm:$0xff] %vm573, 0.0
      %598 = vst.msk [vmem:[#allocation2 + $0xb8] sm:$0x3] %vm576, 0.0
      %599 = vst.msk [vmem:[#allocation2 + $0xc0] sm:$0xff] %vm573, 0.0
      %600 = vst.msk [vmem:[#allocation2 + $0xc8] sm:$0xff] %vm573, 0.0
      %601 = vst.msk [vmem:[#allocation2 + $0xd0] sm:$0x3] %vm576, 0.0
      %602 = vst.msk [vmem:[#allocation2 + $0xd8] sm:$0xff] %vm573, 0.0
      %603 = vst.msk [vmem:[#allocation2 + $0xe0] sm:$0xff] %vm573, 0.0
      %604 = vst.msk [vmem:[#allocation2 + $0xe8] sm:$0x3] %vm576, 0.0
      %605 = vst.msk [vmem:[#allocation2 + $0xf0] sm:$0xff] %vm573, 0.0
      %606 = vst.msk [vmem:[#allocation2 + $0xf8] sm:$0xff] %vm573, 0.0
      %607 = vst.msk [vmem:[#allocation2 + $0x100] sm:$0x3] %vm576, 0.0
      %608 = vst.msk [vmem:[#allocation2 + $0x108] sm:$0xff] %vm573, 0.0
      %609 = vst.msk [vmem:[#allocation2 + $0x110] sm:$0xff] %vm573, 0.0
      %610 = vst.msk [vmem:[#allocation2 + $0x118] sm:$0x3] %vm576, 0.0
      %611 = vst.msk [vmem:[#allocation2 + $0x120] sm:$0xff] %vm573, 0.0
      %612 = vst.msk [vmem:[#allocation2 + $0x128] sm:$0xff] %vm573, 0.0
      %613 = vst.msk [vmem:[#allocation2 + $0x130] sm:$0x3] %vm576, 0.0
      %614 = vst.msk [vmem:[#allocation2 + $0x138] sm:$0xff] %vm573, 0.0
      %615 = vst.msk [vmem:[#allocation2 + $0x140] sm:$0xff] %vm573, 0.0
      %616 = vst.msk [vmem:[#allocation2 + $0x148] sm:$0x3] %vm576, 0.0
      %617 = vst.msk [vmem:[#allocation2 + $0x150] sm:$0xff] %vm573, 0.0
      %618 = vst.msk [vmem:[#allocation2 + $0x158] sm:$0xff] %vm573, 0.0
      %619 = vst.msk [vmem:[#allocation2 + $0x160] sm:$0x3] %vm576, 0.0
      %620 = vst.msk [vmem:[#allocation2 + $0x168] sm:$0xff] %vm573, 0.0
      %621 = vst.msk [vmem:[#allocation2 + $0x170] sm:$0xff] %vm573, 0.0
      %622 = vst.msk [vmem:[#allocation2 + $0x178] sm:$0x3] %vm576, 0.0
      %623 = vst.msk [vmem:[#allocation2 + $0x180] sm:$0xff] %vm573, 0.0
      %624 = vst.msk [vmem:[#allocation2 + $0x188] sm:$0xff] %vm573, 0.0
      %625 = vst.msk [vmem:[#allocation2 + $0x190] sm:$0x3] %vm576, 0.0
      %626 = vst.msk [vmem:[#allocation2 + $0x198] sm:$0xff] %vm573, 0.0
      %627 = vst.msk [vmem:[#allocation2 + $0x1a0] sm:$0xff] %vm573, 0.0
      %628 = vst.msk [vmem:[#allocation2 + $0x1a8] sm:$0x3] %vm576, 0.0
      %s629 = scalar_lea.vmem [#allocation2], 24
      %630 = vst.msk [vmem:[%s629 + $0x1] sm:$0xff] %vm573, %v541
      %631 = vst.msk [vmem:[%s629 + $0x9] sm:$0xff] %vm573, %v542
      %632 = vst.msk [vmem:[%s629 + $0x19] sm:$0xff] %vm573, %v543
      %633 = vst.msk [vmem:[%s629 + $0x21] sm:$0xff] %vm573, %v544
      %634 = vst.msk [vmem:[%s629 + $0x31] sm:$0xff] %vm573, %v545
      %635 = vst.msk [vmem:[%s629 + $0x39] sm:$0xff] %vm573, %v546
      %636 = vst.msk [vmem:[%s629 + $0x49] sm:$0xff] %vm573, %v547
      %637 = vst.msk [vmem:[%s629 + $0x51] sm:$0xff] %vm573, %v548
      %638 = vst.msk [vmem:[%s629 + $0x61] sm:$0xff] %vm573, %v549
      %639 = vst.msk [vmem:[%s629 + $0x69] sm:$0xff] %vm573, %v550
      %640 = vst.msk [vmem:[%s629 + $0x79] sm:$0xff] %vm573, %v551
      %641 = vst.msk [vmem:[%s629 + $0x81] sm:$0xff] %vm573, %v552
      %642 = vst.msk [vmem:[%s629 + $0x91] sm:$0xff] %vm573, %v553
      %643 = vst.msk [vmem:[%s629 + $0x99] sm:$0xff] %vm573, %v554
      %644 = vst.msk [vmem:[%s629 + $0xa9] sm:$0xff] %vm573, %v555
      %645 = vst.msk [vmem:[%s629 + $0xb1] sm:$0xff] %vm573, %v556
      %646 = vst.msk [vmem:[%s629 + $0xc1] sm:$0xff] %vm573, %v557
      %647 = vst.msk [vmem:[%s629 + $0xc9] sm:$0xff] %vm573, %v558
      %648 = vst.msk [vmem:[%s629 + $0xd9] sm:$0xff] %vm573, %v559
      %649 = vst.msk [vmem:[%s629 + $0xe1] sm:$0xff] %vm573, %v560
      %650 = vst.msk [vmem:[%s629 + $0xf1] sm:$0xff] %vm573, %v561
      %651 = vst.msk [vmem:[%s629 + $0xf9] sm:$0xff] %vm573, %v562
      %652 = vst.msk [vmem:[%s629 + $0x109] sm:$0xff] %vm573, %v563
      %653 = vst.msk [vmem:[%s629 + $0x111] sm:$0xff] %vm573, %v564
      %654 = vst.msk [vmem:[%s629 + $0x121] sm:$0xff] %vm573, %v565
      %655 = vst.msk [vmem:[%s629 + $0x129] sm:$0xff] %vm573, %v566
      %656 = vst.msk [vmem:[%s629 + $0x139] sm:$0xff] %vm573, %v567
      %657 = vst.msk [vmem:[%s629 + $0x141] sm:$0xff] %vm573, %v568
      %658 = vst.msk [vmem:[%s629 + $0x151] sm:$0xff] %vm573, %v569
      %659 = vst.msk [vmem:[%s629 + $0x159] sm:$0xff] %vm573, %v570
      %660 = vst.msk [vmem:[%s629 + $0x169] sm:$0xff] %vm573, %v571
      %661 = vst.msk [vmem:[%s629 + $0x171] sm:$0xff] %vm573, %v572
      %v662 = vld [vmem:[#allocation2] sm:$0xff]
      %v663 = vld [vmem:[#allocation2 + $0x8] sm:$0xff]
      %v664 = vld [vmem:[#allocation2 + $0x18] sm:$0xff]
      %v665 = vld [vmem:[#allocation2 + $0x20] sm:$0xff]
      %v666 = vld [vmem:[#allocation2 + $0x30] sm:$0xff]
      %v667 = vld [vmem:[#allocation2 + $0x38] sm:$0xff]
      %v668 = vld [vmem:[#allocation2 + $0x48] sm:$0xff]
      %v669 = vld [vmem:[#allocation2 + $0x50] sm:$0xff]
      %v670 = vld [vmem:[#allocation2 + $0x60] sm:$0xff]
      %v671 = vld [vmem:[#allocation2 + $0x68] sm:$0xff]
      %v672 = vld [vmem:[#allocation2 + $0x78] sm:$0xff]
      %v673 = vld [vmem:[#allocation2 + $0x80] sm:$0xff]
      %v674 = vld [vmem:[#allocation2 + $0x90] sm:$0xff]
      %v675 = vld [vmem:[#allocation2 + $0x98] sm:$0xff]
      %v676 = vld [vmem:[#allocation2 + $0xa8] sm:$0xff]
      %v677 = vld [vmem:[#allocation2 + $0xb0] sm:$0xff]
      %v678 = vld [vmem:[#allocation2 + $0xc0] sm:$0xff]
      %v679 = vld [vmem:[#allocation2 + $0xc8] sm:$0xff]
      %v680 = vld [vmem:[#allocation2 + $0xd8] sm:$0xff]
      %v681 = vld [vmem:[#allocation2 + $0xe0] sm:$0xff]
      %v682 = vld [vmem:[#allocation2 + $0xf0] sm:$0xff]
      %v683 = vld [vmem:[#allocation2 + $0xf8] sm:$0xff]
      %v684 = vld [vmem:[#allocation2 + $0x108] sm:$0xff]
      %v685 = vld [vmem:[#allocation2 + $0x110] sm:$0xff]
      %v686 = vld [vmem:[#allocation2 + $0x120] sm:$0xff]
      %v687 = vld [vmem:[#allocation2 + $0x128] sm:$0xff]
      %v688 = vld [vmem:[#allocation2 + $0x138] sm:$0xff]
      %v689 = vld [vmem:[#allocation2 + $0x140] sm:$0xff]
      %v690 = vld [vmem:[#allocation2 + $0x150] sm:$0xff]
      %v691 = vld [vmem:[#allocation2 + $0x158] sm:$0xff]
      %v692 = vld [vmem:[#allocation2 + $0x168] sm:$0xff]
      %v693 = vld [vmem:[#allocation2 + $0x170] sm:$0xff]
      %v694 = vld [vmem:[#allocation2 + $0x1] sm:$0xff]
      %v695 = vld [vmem:[#allocation2 + $0x9] sm:$0xff]
      %v696 = vld [vmem:[#allocation2 + $0x19] sm:$0xff]
      %v697 = vld [vmem:[#allocation2 + $0x21] sm:$0xff]
      %v698 = vld [vmem:[#allocation2 + $0x31] sm:$0xff]
      %v699 = vld [vmem:[#allocation2 + $0x39] sm:$0xff]
      %v700 = vld [vmem:[#allocation2 + $0x49] sm:$0xff]
      %v701 = vld [vmem:[#allocation2 + $0x51] sm:$0xff]
      %v702 = vld [vmem:[#allocation2 + $0x61] sm:$0xff]
      %v703 = vld [vmem:[#allocation2 + $0x69] sm:$0xff]
      %v704 = vld [vmem:[#allocation2 + $0x79] sm:$0xff]
      %v705 = vld [vmem:[#allocation2 + $0x81] sm:$0xff]
      %v706 = vld [vmem:[#allocation2 + $0x91] sm:$0xff]
      %v707 = vld [vmem:[#allocation2 + $0x99] sm:$0xff]
      %v708 = vld [vmem:[#allocation2 + $0xa9] sm:$0xff]
      %v709 = vld [vmem:[#allocation2 + $0xb1] sm:$0xff]
      %v710 = vld [vmem:[#allocation2 + $0xc1] sm:$0xff]
      %v711 = vld [vmem:[#allocation2 + $0xc9] sm:$0xff]
      %v712 = vld [vmem:[#allocation2 + $0xd9] sm:$0xff]
      %v713 = vld [vmem:[#allocation2 + $0xe1] sm:$0xff]
      %v714 = vld [vmem:[#allocation2 + $0xf1] sm:$0xff]
      %v715 = vld [vmem:[#allocation2 + $0xf9] sm:$0xff]
      %v716 = vld [vmem:[#allocation2 + $0x109] sm:$0xff]
      %v717 = vld [vmem:[#allocation2 + $0x111] sm:$0xff]
      %v718 = vld [vmem:[#allocation2 + $0x121] sm:$0xff]
      %v719 = vld [vmem:[#allocation2 + $0x129] sm:$0xff]
      %v720 = vld [vmem:[#allocation2 + $0x139] sm:$0xff]
      %v721 = vld [vmem:[#allocation2 + $0x141] sm:$0xff]
      %v722 = vld [vmem:[#allocation2 + $0x151] sm:$0xff]
      %v723 = vld [vmem:[#allocation2 + $0x159] sm:$0xff]
      %v724 = vld [vmem:[#allocation2 + $0x169] sm:$0xff]
      %v725 = vld [vmem:[#allocation2 + $0x171] sm:$0xff]
      %v726 = vld [vmem:[#allocation2 + $0x2] sm:$0xff]
      %v727 = vld [vmem:[#allocation2 + $0xa] sm:$0xff]
      %v728 = vld [vmem:[#allocation2 + $0x1a] sm:$0xff]
      %v729 = vld [vmem:[#allocation2 + $0x22] sm:$0xff]
      %v730 = vld [vmem:[#allocation2 + $0x32] sm:$0xff]
      %v731 = vld [vmem:[#allocation2 + $0x3a] sm:$0xff]
      %v732 = vld [vmem:[#allocation2 + $0x4a] sm:$0xff]
      %v733 = vld [vmem:[#allocation2 + $0x52] sm:$0xff]
      %v734 = vld [vmem:[#allocation2 + $0x62] sm:$0xff]
      %v735 = vld [vmem:[#allocation2 + $0x6a] sm:$0xff]
      %v736 = vld [vmem:[#allocation2 + $0x7a] sm:$0xff]
      %v737 = vld [vmem:[#allocation2 + $0x82] sm:$0xff]
      %v738 = vld [vmem:[#allocation2 + $0x92] sm:$0xff]
      %v739 = vld [vmem:[#allocation2 + $0x9a] sm:$0xff]
      %v740 = vld [vmem:[#allocation2 + $0xaa] sm:$0xff]
      %v741 = vld [vmem:[#allocation2 + $0xb2] sm:$0xff]
      %v742 = vld [vmem:[#allocation2 + $0xc2] sm:$0xff]
      %v743 = vld [vmem:[#allocation2 + $0xca] sm:$0xff]
      %v744 = vld [vmem:[#allocation2 + $0xda] sm:$0xff]
      %v745 = vld [vmem:[#allocation2 + $0xe2] sm:$0xff]
      %v746 = vld [vmem:[#allocation2 + $0xf2] sm:$0xff]
      %v747 = vld [vmem:[#allocation2 + $0xfa] sm:$0xff]
      %v748 = vld [vmem:[#allocation2 + $0x10a] sm:$0xff]
      %v749 = vld [vmem:[#allocation2 + $0x112] sm:$0xff]
      %v750 = vld [vmem:[#allocation2 + $0x122] sm:$0xff]
      %v751 = vld [vmem:[#allocation2 + $0x12a] sm:$0xff]
      %v752 = vld [vmem:[#allocation2 + $0x13a] sm:$0xff]
      %v753 = vld [vmem:[#allocation2 + $0x142] sm:$0xff]
      %v754 = vld [vmem:[#allocation2 + $0x152] sm:$0xff]
      %v755 = vld [vmem:[#allocation2 + $0x15a] sm:$0xff]
      %v756 = vld [vmem:[#allocation2 + $0x16a] sm:$0xff]
      %v757 = vld [vmem:[#allocation2 + $0x172] sm:$0xff]
      %v758 = vld [vmem:[%s629] sm:$0xff]
      %v759 = vld [vmem:[%s629 + $0x8] sm:$0xff]
      %v760 = vld [vmem:[%s629 + $0x18] sm:$0xff]
      %v761 = vld [vmem:[%s629 + $0x20] sm:$0xff]
      %v762 = vld [vmem:[%s629 + $0x30] sm:$0xff]
      %v763 = vld [vmem:[%s629 + $0x38] sm:$0xff]
      %v764 = vld [vmem:[%s629 + $0x48] sm:$0xff]
      %v765 = vld [vmem:[%s629 + $0x50] sm:$0xff]
      %v766 = vld [vmem:[%s629 + $0x60] sm:$0xff]
      %v767 = vld [vmem:[%s629 + $0x68] sm:$0xff]
      %v768 = vld [vmem:[%s629 + $0x78] sm:$0xff]
      %v769 = vld [vmem:[%s629 + $0x80] sm:$0xff]
      %v770 = vld [vmem:[%s629 + $0x90] sm:$0xff]
      %v771 = vld [vmem:[%s629 + $0x98] sm:$0xff]
      %v772 = vld [vmem:[%s629 + $0xa8] sm:$0xff]
      %v773 = vld [vmem:[%s629 + $0xb0] sm:$0xff]
      %v774 = vld [vmem:[%s629 + $0xc0] sm:$0xff]
      %v775 = vld [vmem:[%s629 + $0xc8] sm:$0xff]
      %v776 = vld [vmem:[%s629 + $0xd8] sm:$0xff]
      %v777 = vld [vmem:[%s629 + $0xe0] sm:$0xff]
      %v778 = vld [vmem:[%s629 + $0xf0] sm:$0xff]
      %v779 = vld [vmem:[%s629 + $0xf8] sm:$0xff]
      %v780 = vld [vmem:[%s629 + $0x108] sm:$0xff]
      %v781 = vld [vmem:[%s629 + $0x110] sm:$0xff]
      %v782 = vld [vmem:[%s629 + $0x120] sm:$0xff]
      %v783 = vld [vmem:[%s629 + $0x128] sm:$0xff]
      %v784 = vld [vmem:[%s629 + $0x138] sm:$0xff]
      %v785 = vld [vmem:[%s629 + $0x140] sm:$0xff]
      %v786 = vld [vmem:[%s629 + $0x150] sm:$0xff]
      %v787 = vld [vmem:[%s629 + $0x158] sm:$0xff]
      %v788 = vld [vmem:[%s629 + $0x168] sm:$0xff]
      %v789 = vld [vmem:[%s629 + $0x170] sm:$0xff]
      %v790 = vld [vmem:[%s629 + $0x1] sm:$0xff]
      %v791 = vld [vmem:[%s629 + $0x9] sm:$0xff]
      %v792 = vld [vmem:[%s629 + $0x19] sm:$0xff]
      %v793 = vld [vmem:[%s629 + $0x21] sm:$0xff]
      %v794 = vld [vmem:[%s629 + $0x31] sm:$0xff]
      %v795 = vld [vmem:[%s629 + $0x39] sm:$0xff]
      %v796 = vld [vmem:[%s629 + $0x49] sm:$0xff]
      %v797 = vld [vmem:[%s629 + $0x51] sm:$0xff]
      %v798 = vld [vmem:[%s629 + $0x61] sm:$0xff]
      %v799 = vld [vmem:[%s629 + $0x69] sm:$0xff]
      %v800 = vld [vmem:[%s629 + $0x79] sm:$0xff]
      %v801 = vld [vmem:[%s629 + $0x81] sm:$0xff]
      %v802 = vld [vmem:[%s629 + $0x91] sm:$0xff]
      %v803 = vld [vmem:[%s629 + $0x99] sm:$0xff]
      %v804 = vld [vmem:[%s629 + $0xa9] sm:$0xff]
      %v805 = vld [vmem:[%s629 + $0xb1] sm:$0xff]
      %v806 = vld [vmem:[%s629 + $0xc1] sm:$0xff]
      %v807 = vld [vmem:[%s629 + $0xc9] sm:$0xff]
      %v808 = vld [vmem:[%s629 + $0xd9] sm:$0xff]
      %v809 = vld [vmem:[%s629 + $0xe1] sm:$0xff]
      %v810 = vld [vmem:[%s629 + $0xf1] sm:$0xff]
      %v811 = vld [vmem:[%s629 + $0xf9] sm:$0xff]
      %v812 = vld [vmem:[%s629 + $0x109] sm:$0xff]
      %v813 = vld [vmem:[%s629 + $0x111] sm:$0xff]
      %v814 = vld [vmem:[%s629 + $0x121] sm:$0xff]
      %v815 = vld [vmem:[%s629 + $0x129] sm:$0xff]
      %v816 = vld [vmem:[%s629 + $0x139] sm:$0xff]
      %v817 = vld [vmem:[%s629 + $0x141] sm:$0xff]
      %v818 = vld [vmem:[%s629 + $0x151] sm:$0xff]
      %v819 = vld [vmem:[%s629 + $0x159] sm:$0xff]
      %v820 = vld [vmem:[%s629 + $0x169] sm:$0xff]
      %v821 = vld [vmem:[%s629 + $0x171] sm:$0xff]
      %v822 = vld [vmem:[%s629 + $0x2] sm:$0xff]
      %v823 = vld [vmem:[%s629 + $0xa] sm:$0xff]
      %v824 = vld [vmem:[%s629 + $0x1a] sm:$0xff]
      %v825 = vld [vmem:[%s629 + $0x22] sm:$0xff]
      %v826 = vld [vmem:[%s629 + $0x32] sm:$0xff]
      %v827 = vld [vmem:[%s629 + $0x3a] sm:$0xff]
      %v828 = vld [vmem:[%s629 + $0x4a] sm:$0xff]
      %v829 = vld [vmem:[%s629 + $0x52] sm:$0xff]
      %v830 = vld [vmem:[%s629 + $0x62] sm:$0xff]
      %v831 = vld [vmem:[%s629 + $0x6a] sm:$0xff]
      %v832 = vld [vmem:[%s629 + $0x7a] sm:$0xff]
      %v833 = vld [vmem:[%s629 + $0x82] sm:$0xff]
      %v834 = vld [vmem:[%s629 + $0x92] sm:$0xff]
      %v835 = vld [vmem:[%s629 + $0x9a] sm:$0xff]
      %v836 = vld [vmem:[%s629 + $0xaa] sm:$0xff]
      %v837 = vld [vmem:[%s629 + $0xb2] sm:$0xff]
      %v838 = vld [vmem:[%s629 + $0xc2] sm:$0xff]
      %v839 = vld [vmem:[%s629 + $0xca] sm:$0xff]
      %v840 = vld [vmem:[%s629 + $0xda] sm:$0xff]
      %v841 = vld [vmem:[%s629 + $0xe2] sm:$0xff]
      %v842 = vld [vmem:[%s629 + $0xf2] sm:$0xff]
      %v843 = vld [vmem:[%s629 + $0xfa] sm:$0xff]
      %v844 = vld [vmem:[%s629 + $0x10a] sm:$0xff]
      %v845 = vld [vmem:[%s629 + $0x112] sm:$0xff]
      %v846 = vld [vmem:[%s629 + $0x122] sm:$0xff]
      %v847 = vld [vmem:[%s629 + $0x12a] sm:$0xff]
      %v848 = vld [vmem:[%s629 + $0x13a] sm:$0xff]
      %v849 = vld [vmem:[%s629 + $0x142] sm:$0xff]
      %v850 = vld [vmem:[%s629 + $0x152] sm:$0xff]
      %v851 = vld [vmem:[%s629 + $0x15a] sm:$0xff]
      %v852 = vld [vmem:[%s629 + $0x16a] sm:$0xff]
      %v853 = vld [vmem:[%s629 + $0x172] sm:$0xff]
      %s854 = scalar_lea.vmem [#allocation2], 48
      %v855 = vld [vmem:[%s854] sm:$0xff]
      %v856 = vld [vmem:[%s854 + $0x8] sm:$0xff]
      %v857 = vld [vmem:[%s854 + $0x18] sm:$0xff]
      %v858 = vld [vmem:[%s854 + $0x20] sm:$0xff]
      %v859 = vld [vmem:[%s854 + $0x30] sm:$0xff]
      %v860 = vld [vmem:[%s854 + $0x38] sm:$0xff]
      %v861 = vld [vmem:[%s854 + $0x48] sm:$0xff]
      %v862 = vld [vmem:[%s854 + $0x50] sm:$0xff]
      %v863 = vld [vmem:[%s854 + $0x60] sm:$0xff]
      %v864 = vld [vmem:[%s854 + $0x68] sm:$0xff]
      %v865 = vld [vmem:[%s854 + $0x78] sm:$0xff]
      %v866 = vld [vmem:[%s854 + $0x80] sm:$0xff]
      %v867 = vld [vmem:[%s854 + $0x90] sm:$0xff]
      %v868 = vld [vmem:[%s854 + $0x98] sm:$0xff]
      %v869 = vld [vmem:[%s854 + $0xa8] sm:$0xff]
      %v870 = vld [vmem:[%s854 + $0xb0] sm:$0xff]
      %v871 = vld [vmem:[%s854 + $0xc0] sm:$0xff]
      %v872 = vld [vmem:[%s854 + $0xc8] sm:$0xff]
      %v873 = vld [vmem:[%s854 + $0xd8] sm:$0xff]
      %v874 = vld [vmem:[%s854 + $0xe0] sm:$0xff]
      %v875 = vld [vmem:[%s854 + $0xf0] sm:$0xff]
      %v876 = vld [vmem:[%s854 + $0xf8] sm:$0xff]
      %v877 = vld [vmem:[%s854 + $0x108] sm:$0xff]
      %v878 = vld [vmem:[%s854 + $0x110] sm:$0xff]
      %v879 = vld [vmem:[%s854 + $0x120] sm:$0xff]
      %v880 = vld [vmem:[%s854 + $0x128] sm:$0xff]
      %v881 = vld [vmem:[%s854 + $0x138] sm:$0xff]
      %v882 = vld [vmem:[%s854 + $0x140] sm:$0xff]
      %v883 = vld [vmem:[%s854 + $0x150] sm:$0xff]
      %v884 = vld [vmem:[%s854 + $0x158] sm:$0xff]
      %v885 = vld [vmem:[%s854 + $0x168] sm:$0xff]
      %v886 = vld [vmem:[%s854 + $0x170] sm:$0xff]
      %v887 = vld [vmem:[%s854 + $0x1] sm:$0xff]
      %v888 = vld [vmem:[%s854 + $0x9] sm:$0xff]
      %v889 = vld [vmem:[%s854 + $0x19] sm:$0xff]
      %v890 = vld [vmem:[%s854 + $0x21] sm:$0xff]
      %v891 = vld [vmem:[%s854 + $0x31] sm:$0xff]
      %v892 = vld [vmem:[%s854 + $0x39] sm:$0xff]
      %v893 = vld [vmem:[%s854 + $0x49] sm:$0xff]
      %v894 = vld [vmem:[%s854 + $0x51] sm:$0xff]
      %v895 = vld [vmem:[%s854 + $0x61] sm:$0xff]
      %v896 = vld [vmem:[%s854 + $0x69] sm:$0xff]
      %v897 = vld [vmem:[%s854 + $0x79] sm:$0xff]
      %v898 = vld [vmem:[%s854 + $0x81] sm:$0xff]
      %v899 = vld [vmem:[%s854 + $0x91] sm:$0xff]
      %v900 = vld [vmem:[%s854 + $0x99] sm:$0xff]
      %v901 = vld [vmem:[%s854 + $0xa9] sm:$0xff]
      %v902 = vld [vmem:[%s854 + $0xb1] sm:$0xff]
      %v903 = vld [vmem:[%s854 + $0xc1] sm:$0xff]
      %v904 = vld [vmem:[%s854 + $0xc9] sm:$0xff]
      %v905 = vld [vmem:[%s854 + $0xd9] sm:$0xff]
      %v906 = vld [vmem:[%s854 + $0xe1] sm:$0xff]
      %v907 = vld [vmem:[%s854 + $0xf1] sm:$0xff]
      %v908 = vld [vmem:[%s854 + $0xf9] sm:$0xff]
      %v909 = vld [vmem:[%s854 + $0x109] sm:$0xff]
      %v910 = vld [vmem:[%s854 + $0x111] sm:$0xff]
      %v911 = vld [vmem:[%s854 + $0x121] sm:$0xff]
      %v912 = vld [vmem:[%s854 + $0x129] sm:$0xff]
      %v913 = vld [vmem:[%s854 + $0x139] sm:$0xff]
      %v914 = vld [vmem:[%s854 + $0x141] sm:$0xff]
      %v915 = vld [vmem:[%s854 + $0x151] sm:$0xff]
      %v916 = vld [vmem:[%s854 + $0x159] sm:$0xff]
      %v917 = vld [vmem:[%s854 + $0x169] sm:$0xff]
      %v918 = vld [vmem:[%s854 + $0x171] sm:$0xff]
      %v919 = vld [vmem:[%s854 + $0x2] sm:$0xff]
      %v920 = vld [vmem:[%s854 + $0xa] sm:$0xff]
      %v921 = vld [vmem:[%s854 + $0x1a] sm:$0xff]
      %v922 = vld [vmem:[%s854 + $0x22] sm:$0xff]
      %v923 = vld [vmem:[%s854 + $0x32] sm:$0xff]
      %v924 = vld [vmem:[%s854 + $0x3a] sm:$0xff]
      %v925 = vld [vmem:[%s854 + $0x4a] sm:$0xff]
      %v926 = vld [vmem:[%s854 + $0x52] sm:$0xff]
      %v927 = vld [vmem:[%s854 + $0x62] sm:$0xff]
      %v928 = vld [vmem:[%s854 + $0x6a] sm:$0xff]
      %v929 = vld [vmem:[%s854 + $0x7a] sm:$0xff]
      %v930 = vld [vmem:[%s854 + $0x82] sm:$0xff]
      %v931 = vld [vmem:[%s854 + $0x92] sm:$0xff]
      %v932 = vld [vmem:[%s854 + $0x9a] sm:$0xff]
      %v933 = vld [vmem:[%s854 + $0xaa] sm:$0xff]
      %v934 = vld [vmem:[%s854 + $0xb2] sm:$0xff]
      %v935 = vld [vmem:[%s854 + $0xc2] sm:$0xff]
      %v936 = vld [vmem:[%s854 + $0xca] sm:$0xff]
      %v937 = vld [vmem:[%s854 + $0xda] sm:$0xff]
      %v938 = vld [vmem:[%s854 + $0xe2] sm:$0xff]
      %v939 = vld [vmem:[%s854 + $0xf2] sm:$0xff]
      %v940 = vld [vmem:[%s854 + $0xfa] sm:$0xff]
      %v941 = vld [vmem:[%s854 + $0x10a] sm:$0xff]
      %v942 = vld [vmem:[%s854 + $0x112] sm:$0xff]
      %v943 = vld [vmem:[%s854 + $0x122] sm:$0xff]
      %v944 = vld [vmem:[%s854 + $0x12a] sm:$0xff]
      %v945 = vld [vmem:[%s854 + $0x13a] sm:$0xff]
      %v946 = vld [vmem:[%s854 + $0x142] sm:$0xff]
      %v947 = vld [vmem:[%s854 + $0x152] sm:$0xff]
      %v948 = vld [vmem:[%s854 + $0x15a] sm:$0xff]
      %v949 = vld [vmem:[%s854 + $0x16a] sm:$0xff]
      %v950 = vld [vmem:[%s854 + $0x172] sm:$0xff]
      %983 = vrot.lane.b32.xlu0 %v694, 8
      %v984 = vpop.permute.xlu0 %983
      %985 = vrot.lane.b32.xlu0 %v695, 8
      %v986 = vpop.permute.xlu0 %985
      %987 = vrot.lane.b32.xlu0 %v696, 8
      %v988 = vpop.permute.xlu0 %987
      %989 = vrot.lane.b32.xlu0 %v697, 8
      %v990 = vpop.permute.xlu0 %989
      %991 = vrot.lane.b32.xlu0 %v698, 8
      %v992 = vpop.permute.xlu0 %991
      %993 = vrot.lane.b32.xlu0 %v699, 8
      %v994 = vpop.permute.xlu0 %993
      %995 = vrot.lane.b32.xlu0 %v700, 8
      %v996 = vpop.permute.xlu0 %995
      %997 = vrot.lane.b32.xlu0 %v701, 8
      %v998 = vpop.permute.xlu0 %997
      %999 = vrot.lane.b32.xlu0 %v702, 8
      %v1000 = vpop.permute.xlu0 %999
      %1001 = vrot.lane.b32.xlu0 %v703, 8
      %v1002 = vpop.permute.xlu0 %1001
      %1003 = vrot.lane.b32.xlu0 %v704, 8
      %v1004 = vpop.permute.xlu0 %1003
      %1005 = vrot.lane.b32.xlu0 %v705, 8
      %v1006 = vpop.permute.xlu0 %1005
      %1007 = vrot.lane.b32.xlu0 %v706, 8
      %v1008 = vpop.permute.xlu0 %1007
      %1009 = vrot.lane.b32.xlu0 %v707, 8
      %v1010 = vpop.permute.xlu0 %1009
      %1011 = vrot.lane.b32.xlu0 %v708, 8
      %v1012 = vpop.permute.xlu0 %1011
      %1013 = vrot.lane.b32.xlu0 %v709, 8
      %v1014 = vpop.permute.xlu0 %1013
      %1015 = vrot.lane.b32.xlu0 %v710, 8
      %v1016 = vpop.permute.xlu0 %1015
      %1017 = vrot.lane.b32.xlu0 %v711, 8
      %v1018 = vpop.permute.xlu0 %1017
      %1019 = vrot.lane.b32.xlu0 %v712, 8
      %v1020 = vpop.permute.xlu0 %1019
      %1021 = vrot.lane.b32.xlu0 %v713, 8
      %v1022 = vpop.permute.xlu0 %1021
      %1023 = vrot.lane.b32.xlu0 %v714, 8
      %v1024 = vpop.permute.xlu0 %1023
      %1025 = vrot.lane.b32.xlu0 %v715, 8
      %v1026 = vpop.permute.xlu0 %1025
      %1027 = vrot.lane.b32.xlu0 %v716, 8
      %v1028 = vpop.permute.xlu0 %1027
      %1029 = vrot.lane.b32.xlu0 %v717, 8
      %v1030 = vpop.permute.xlu0 %1029
      %1031 = vrot.lane.b32.xlu0 %v718, 8
      %v1032 = vpop.permute.xlu0 %1031
      %1033 = vrot.lane.b32.xlu0 %v719, 8
      %v1034 = vpop.permute.xlu0 %1033
      %1035 = vrot.lane.b32.xlu0 %v720, 8
      %v1036 = vpop.permute.xlu0 %1035
      %1037 = vrot.lane.b32.xlu0 %v721, 8
      %v1038 = vpop.permute.xlu0 %1037
      %1039 = vrot.lane.b32.xlu0 %v722, 8
      %v1040 = vpop.permute.xlu0 %1039
      %1041 = vrot.lane.b32.xlu0 %v723, 8
      %v1042 = vpop.permute.xlu0 %1041
      %1043 = vrot.lane.b32.xlu0 %v724, 8
      %v1044 = vpop.permute.xlu0 %1043
      %1045 = vrot.lane.b32.xlu0 %v725, 8
      %v1046 = vpop.permute.xlu0 %1045
      %1111 = vrot.lane.b32.xlu0 %v726, 16
      %v1112 = vpop.permute.xlu0 %1111
      %1113 = vrot.lane.b32.xlu0 %v727, 16
      %v1114 = vpop.permute.xlu0 %1113
      %1115 = vrot.lane.b32.xlu0 %v728, 16
      %v1116 = vpop.permute.xlu0 %1115
      %1117 = vrot.lane.b32.xlu0 %v729, 16
      %v1118 = vpop.permute.xlu0 %1117
      %1119 = vrot.lane.b32.xlu0 %v730, 16
      %v1120 = vpop.permute.xlu0 %1119
      %1121 = vrot.lane.b32.xlu0 %v731, 16
      %v1122 = vpop.permute.xlu0 %1121
      %1123 = vrot.lane.b32.xlu0 %v732, 16
      %v1124 = vpop.permute.xlu0 %1123
      %1125 = vrot.lane.b32.xlu0 %v733, 16
      %v1126 = vpop.permute.xlu0 %1125
      %1127 = vrot.lane.b32.xlu0 %v734, 16
      %v1128 = vpop.permute.xlu0 %1127
      %1129 = vrot.lane.b32.xlu0 %v735, 16
      %v1130 = vpop.permute.xlu0 %1129
      %1131 = vrot.lane.b32.xlu0 %v736, 16
      %v1132 = vpop.permute.xlu0 %1131
      %1133 = vrot.lane.b32.xlu0 %v737, 16
      %v1134 = vpop.permute.xlu0 %1133
      %1135 = vrot.lane.b32.xlu0 %v738, 16
      %v1136 = vpop.permute.xlu0 %1135
      %1137 = vrot.lane.b32.xlu0 %v739, 16
      %v1138 = vpop.permute.xlu0 %1137
      %1139 = vrot.lane.b32.xlu0 %v740, 16
      %v1140 = vpop.permute.xlu0 %1139
      %1141 = vrot.lane.b32.xlu0 %v741, 16
      %v1142 = vpop.permute.xlu0 %1141
      %1143 = vrot.lane.b32.xlu0 %v742, 16
      %v1144 = vpop.permute.xlu0 %1143
      %1145 = vrot.lane.b32.xlu0 %v743, 16
      %v1146 = vpop.permute.xlu0 %1145
      %1147 = vrot.lane.b32.xlu0 %v744, 16
      %v1148 = vpop.permute.xlu0 %1147
      %1149 = vrot.lane.b32.xlu0 %v745, 16
      %v1150 = vpop.permute.xlu0 %1149
      %1151 = vrot.lane.b32.xlu0 %v746, 16
      %v1152 = vpop.permute.xlu0 %1151
      %1153 = vrot.lane.b32.xlu0 %v747, 16
      %v1154 = vpop.permute.xlu0 %1153
      %1155 = vrot.lane.b32.xlu0 %v748, 16
      %v1156 = vpop.permute.xlu0 %1155
      %1157 = vrot.lane.b32.xlu0 %v749, 16
      %v1158 = vpop.permute.xlu0 %1157
      %1159 = vrot.lane.b32.xlu0 %v750, 16
      %v1160 = vpop.permute.xlu0 %1159
      %1161 = vrot.lane.b32.xlu0 %v751, 16
      %v1162 = vpop.permute.xlu0 %1161
      %1163 = vrot.lane.b32.xlu0 %v752, 16
      %v1164 = vpop.permute.xlu0 %1163
      %1165 = vrot.lane.b32.xlu0 %v753, 16
      %v1166 = vpop.permute.xlu0 %1165
      %1167 = vrot.lane.b32.xlu0 %v754, 16
      %v1168 = vpop.permute.xlu0 %1167
      %1169 = vrot.lane.b32.xlu0 %v755, 16
      %v1170 = vpop.permute.xlu0 %1169
      %1171 = vrot.lane.b32.xlu0 %v756, 16
      %v1172 = vpop.permute.xlu0 %1171
      %1173 = vrot.lane.b32.xlu0 %v757, 16
      %v1174 = vpop.permute.xlu0 %1173
      %1239 = vrot.lane.b32.xlu0 %v758, 24
      %v1240 = vpop.permute.xlu0 %1239
      %1241 = vrot.lane.b32.xlu0 %v759, 24
      %v1242 = vpop.permute.xlu0 %1241
      %1243 = vrot.lane.b32.xlu0 %v760, 24
      %v1244 = vpop.permute.xlu0 %1243
      %1245 = vrot.lane.b32.xlu0 %v761, 24
      %v1246 = vpop.permute.xlu0 %1245
      %1247 = vrot.lane.b32.xlu0 %v762, 24
      %v1248 = vpop.permute.xlu0 %1247
      %1249 = vrot.lane.b32.xlu0 %v763, 24
      %v1250 = vpop.permute.xlu0 %1249
      %1251 = vrot.lane.b32.xlu0 %v764, 24
      %v1252 = vpop.permute.xlu0 %1251
      %1253 = vrot.lane.b32.xlu0 %v765, 24
      %v1254 = vpop.permute.xlu0 %1253
      %1255 = vrot.lane.b32.xlu0 %v766, 24
      %v1256 = vpop.permute.xlu0 %1255
      %1257 = vrot.lane.b32.xlu0 %v767, 24
      %v1258 = vpop.permute.xlu0 %1257
      %1259 = vrot.lane.b32.xlu0 %v768, 24
      %v1260 = vpop.permute.xlu0 %1259
      %1261 = vrot.lane.b32.xlu0 %v769, 24
      %v1262 = vpop.permute.xlu0 %1261
      %1263 = vrot.lane.b32.xlu0 %v770, 24
      %v1264 = vpop.permute.xlu0 %1263
      %1265 = vrot.lane.b32.xlu0 %v771, 24
      %v1266 = vpop.permute.xlu0 %1265
      %1267 = vrot.lane.b32.xlu0 %v772, 24
      %v1268 = vpop.permute.xlu0 %1267
      %1269 = vrot.lane.b32.xlu0 %v773, 24
      %v1270 = vpop.permute.xlu0 %1269
      %1271 = vrot.lane.b32.xlu0 %v774, 24
      %v1272 = vpop.permute.xlu0 %1271
      %1273 = vrot.lane.b32.xlu0 %v775, 24
      %v1274 = vpop.permute.xlu0 %1273
      %1275 = vrot.lane.b32.xlu0 %v776, 24
      %v1276 = vpop.permute.xlu0 %1275
      %1277 = vrot.lane.b32.xlu0 %v777, 24
      %v1278 = vpop.permute.xlu0 %1277
      %1279 = vrot.lane.b32.xlu0 %v778, 24
      %v1280 = vpop.permute.xlu0 %1279
      %1281 = vrot.lane.b32.xlu0 %v779, 24
      %v1282 = vpop.permute.xlu0 %1281
      %1283 = vrot.lane.b32.xlu0 %v780, 24
      %v1284 = vpop.permute.xlu0 %1283
      %1285 = vrot.lane.b32.xlu0 %v781, 24
      %v1286 = vpop.permute.xlu0 %1285
      %1287 = vrot.lane.b32.xlu0 %v782, 24
      %v1288 = vpop.permute.xlu0 %1287
      %1289 = vrot.lane.b32.xlu0 %v783, 24
      %v1290 = vpop.permute.xlu0 %1289
      %1291 = vrot.lane.b32.xlu0 %v784, 24
      %v1292 = vpop.permute.xlu0 %1291
      %1293 = vrot.lane.b32.xlu0 %v785, 24
      %v1294 = vpop.permute.xlu0 %1293
      %1295 = vrot.lane.b32.xlu0 %v786, 24
      %v1296 = vpop.permute.xlu0 %1295
      %1297 = vrot.lane.b32.xlu0 %v787, 24
      %v1298 = vpop.permute.xlu0 %1297
      %1299 = vrot.lane.b32.xlu0 %v788, 24
      %v1300 = vpop.permute.xlu0 %1299
      %1301 = vrot.lane.b32.xlu0 %v789, 24
      %v1302 = vpop.permute.xlu0 %1301
      %1367 = vrot.lane.b32.xlu0 %v790, 32
      %v1368 = vpop.permute.xlu0 %1367
      %1369 = vrot.lane.b32.xlu0 %v791, 32
      %v1370 = vpop.permute.xlu0 %1369
      %1371 = vrot.lane.b32.xlu0 %v792, 32
      %v1372 = vpop.permute.xlu0 %1371
      %1373 = vrot.lane.b32.xlu0 %v793, 32
      %v1374 = vpop.permute.xlu0 %1373
      %1375 = vrot.lane.b32.xlu0 %v794, 32
      %v1376 = vpop.permute.xlu0 %1375
      %1377 = vrot.lane.b32.xlu0 %v795, 32
      %v1378 = vpop.permute.xlu0 %1377
      %1379 = vrot.lane.b32.xlu0 %v796, 32
      %v1380 = vpop.permute.xlu0 %1379
      %1381 = vrot.lane.b32.xlu0 %v797, 32
      %v1382 = vpop.permute.xlu0 %1381
      %1383 = vrot.lane.b32.xlu0 %v798, 32
      %v1384 = vpop.permute.xlu0 %1383
      %1385 = vrot.lane.b32.xlu0 %v799, 32
      %v1386 = vpop.permute.xlu0 %1385
      %1387 = vrot.lane.b32.xlu0 %v800, 32
      %v1388 = vpop.permute.xlu0 %1387
      %1389 = vrot.lane.b32.xlu0 %v801, 32
      %v1390 = vpop.permute.xlu0 %1389
      %1391 = vrot.lane.b32.xlu0 %v802, 32
      %v1392 = vpop.permute.xlu0 %1391
      %1393 = vrot.lane.b32.xlu0 %v803, 32
      %v1394 = vpop.permute.xlu0 %1393
      %1395 = vrot.lane.b32.xlu0 %v804, 32
      %v1396 = vpop.permute.xlu0 %1395
      %1397 = vrot.lane.b32.xlu0 %v805, 32
      %v1398 = vpop.permute.xlu0 %1397
      %1399 = vrot.lane.b32.xlu0 %v806, 32
      %v1400 = vpop.permute.xlu0 %1399
      %1401 = vrot.lane.b32.xlu0 %v807, 32
      %v1402 = vpop.permute.xlu0 %1401
      %1403 = vrot.lane.b32.xlu0 %v808, 32
      %v1404 = vpop.permute.xlu0 %1403
      %1405 = vrot.lane.b32.xlu0 %v809, 32
      %v1406 = vpop.permute.xlu0 %1405
      %1407 = vrot.lane.b32.xlu0 %v810, 32
      %v1408 = vpop.permute.xlu0 %1407
      %1409 = vrot.lane.b32.xlu0 %v811, 32
      %v1410 = vpop.permute.xlu0 %1409
      %1411 = vrot.lane.b32.xlu0 %v812, 32
      %v1412 = vpop.permute.xlu0 %1411
      %1413 = vrot.lane.b32.xlu0 %v813, 32
      %v1414 = vpop.permute.xlu0 %1413
      %1415 = vrot.lane.b32.xlu0 %v814, 32
      %v1416 = vpop.permute.xlu0 %1415
      %1417 = vrot.lane.b32.xlu0 %v815, 32
      %v1418 = vpop.permute.xlu0 %1417
      %1419 = vrot.lane.b32.xlu0 %v816, 32
      %v1420 = vpop.permute.xlu0 %1419
      %1421 = vrot.lane.b32.xlu0 %v817, 32
      %v1422 = vpop.permute.xlu0 %1421
      %1423 = vrot.lane.b32.xlu0 %v818, 32
      %v1424 = vpop.permute.xlu0 %1423
      %1425 = vrot.lane.b32.xlu0 %v819, 32
      %v1426 = vpop.permute.xlu0 %1425
      %1427 = vrot.lane.b32.xlu0 %v820, 32
      %v1428 = vpop.permute.xlu0 %1427
      %1429 = vrot.lane.b32.xlu0 %v821, 32
      %v1430 = vpop.permute.xlu0 %1429
      %1495 = vrot.lane.b32.xlu0 %v822, 40
      %v1496 = vpop.permute.xlu0 %1495
      %1497 = vrot.lane.b32.xlu0 %v823, 40
      %v1498 = vpop.permute.xlu0 %1497
      %1499 = vrot.lane.b32.xlu0 %v824, 40
      %v1500 = vpop.permute.xlu0 %1499
      %1501 = vrot.lane.b32.xlu0 %v825, 40
      %v1502 = vpop.permute.xlu0 %1501
      %1503 = vrot.lane.b32.xlu0 %v826, 40
      %v1504 = vpop.permute.xlu0 %1503
      %1505 = vrot.lane.b32.xlu0 %v827, 40
      %v1506 = vpop.permute.xlu0 %1505
      %1507 = vrot.lane.b32.xlu0 %v828, 40
      %v1508 = vpop.permute.xlu0 %1507
      %1509 = vrot.lane.b32.xlu0 %v829, 40
      %v1510 = vpop.permute.xlu0 %1509
      %1511 = vrot.lane.b32.xlu0 %v830, 40
      %v1512 = vpop.permute.xlu0 %1511
      %1513 = vrot.lane.b32.xlu0 %v831, 40
      %v1514 = vpop.permute.xlu0 %1513
      %1515 = vrot.lane.b32.xlu0 %v832, 40
      %v1516 = vpop.permute.xlu0 %1515
      %1517 = vrot.lane.b32.xlu0 %v833, 40
      %v1518 = vpop.permute.xlu0 %1517
      %1519 = vrot.lane.b32.xlu0 %v834, 40
      %v1520 = vpop.permute.xlu0 %1519
      %1521 = vrot.lane.b32.xlu0 %v835, 40
      %v1522 = vpop.permute.xlu0 %1521
      %1523 = vrot.lane.b32.xlu0 %v836, 40
      %v1524 = vpop.permute.xlu0 %1523
      %1525 = vrot.lane.b32.xlu0 %v837, 40
      %v1526 = vpop.permute.xlu0 %1525
      %1527 = vrot.lane.b32.xlu0 %v838, 40
      %v1528 = vpop.permute.xlu0 %1527
      %1529 = vrot.lane.b32.xlu0 %v839, 40
      %v1530 = vpop.permute.xlu0 %1529
      %1531 = vrot.lane.b32.xlu0 %v840, 40
      %v1532 = vpop.permute.xlu0 %1531
      %1533 = vrot.lane.b32.xlu0 %v841, 40
      %v1534 = vpop.permute.xlu0 %1533
      %1535 = vrot.lane.b32.xlu0 %v842, 40
      %v1536 = vpop.permute.xlu0 %1535
      %1537 = vrot.lane.b32.xlu0 %v843, 40
      %v1538 = vpop.permute.xlu0 %1537
      %1539 = vrot.lane.b32.xlu0 %v844, 40
      %v1540 = vpop.permute.xlu0 %1539
      %1541 = vrot.lane.b32.xlu0 %v845, 40
      %v1542 = vpop.permute.xlu0 %1541
      %1543 = vrot.lane.b32.xlu0 %v846, 40
      %v1544 = vpop.permute.xlu0 %1543
      %1545 = vrot.lane.b32.xlu0 %v847, 40
      %v1546 = vpop.permute.xlu0 %1545
      %1547 = vrot.lane.b32.xlu0 %v848, 40
      %v1548 = vpop.permute.xlu0 %1547
      %1549 = vrot.lane.b32.xlu0 %v849, 40
      %v1550 = vpop.permute.xlu0 %1549
      %1551 = vrot.lane.b32.xlu0 %v850, 40
      %v1552 = vpop.permute.xlu0 %1551
      %1553 = vrot.lane.b32.xlu0 %v851, 40
      %v1554 = vpop.permute.xlu0 %1553
      %1555 = vrot.lane.b32.xlu0 %v852, 40
      %v1556 = vpop.permute.xlu0 %1555
      %1557 = vrot.lane.b32.xlu0 %v853, 40
      %v1558 = vpop.permute.xlu0 %1557
      %1623 = vrot.lane.b32.xlu0 %v855, 48
      %v1624 = vpop.permute.xlu0 %1623
      %1625 = vrot.lane.b32.xlu0 %v856, 48
      %v1626 = vpop.permute.xlu0 %1625
      %1627 = vrot.lane.b32.xlu0 %v857, 48
      %v1628 = vpop.permute.xlu0 %1627
      %1629 = vrot.lane.b32.xlu0 %v858, 48
      %v1630 = vpop.permute.xlu0 %1629
      %1631 = vrot.lane.b32.xlu0 %v859, 48
      %v1632 = vpop.permute.xlu0 %1631
      %1633 = vrot.lane.b32.xlu0 %v860, 48
      %v1634 = vpop.permute.xlu0 %1633
      %1635 = vrot.lane.b32.xlu0 %v861, 48
      %v1636 = vpop.permute.xlu0 %1635
      %1637 = vrot.lane.b32.xlu0 %v862, 48
      %v1638 = vpop.permute.xlu0 %1637
      %1639 = vrot.lane.b32.xlu0 %v863, 48
      %v1640 = vpop.permute.xlu0 %1639
      %1641 = vrot.lane.b32.xlu0 %v864, 48
      %v1642 = vpop.permute.xlu0 %1641
      %1643 = vrot.lane.b32.xlu0 %v865, 48
      %v1644 = vpop.permute.xlu0 %1643
      %1645 = vrot.lane.b32.xlu0 %v866, 48
      %v1646 = vpop.permute.xlu0 %1645
      %1647 = vrot.lane.b32.xlu0 %v867, 48
      %v1648 = vpop.permute.xlu0 %1647
      %1649 = vrot.lane.b32.xlu0 %v868, 48
      %v1650 = vpop.permute.xlu0 %1649
      %1651 = vrot.lane.b32.xlu0 %v869, 48
      %v1652 = vpop.permute.xlu0 %1651
      %1653 = vrot.lane.b32.xlu0 %v870, 48
      %v1654 = vpop.permute.xlu0 %1653
      %1655 = vrot.lane.b32.xlu0 %v871, 48
      %v1656 = vpop.permute.xlu0 %1655
      %1657 = vrot.lane.b32.xlu0 %v872, 48
      %v1658 = vpop.permute.xlu0 %1657
      %1659 = vrot.lane.b32.xlu0 %v873, 48
      %v1660 = vpop.permute.xlu0 %1659
      %1661 = vrot.lane.b32.xlu0 %v874, 48
      %v1662 = vpop.permute.xlu0 %1661
      %1663 = vrot.lane.b32.xlu0 %v875, 48
      %v1664 = vpop.permute.xlu0 %1663
      %1665 = vrot.lane.b32.xlu0 %v876, 48
      %v1666 = vpop.permute.xlu0 %1665
      %1667 = vrot.lane.b32.xlu0 %v877, 48
      %v1668 = vpop.permute.xlu0 %1667
      %1669 = vrot.lane.b32.xlu0 %v878, 48
      %v1670 = vpop.permute.xlu0 %1669
      %1671 = vrot.lane.b32.xlu0 %v879, 48
      %v1672 = vpop.permute.xlu0 %1671
      %1673 = vrot.lane.b32.xlu0 %v880, 48
      %v1674 = vpop.permute.xlu0 %1673
      %1675 = vrot.lane.b32.xlu0 %v881, 48
      %v1676 = vpop.permute.xlu0 %1675
      %1677 = vrot.lane.b32.xlu0 %v882, 48
      %v1678 = vpop.permute.xlu0 %1677
      %1679 = vrot.lane.b32.xlu0 %v883, 48
      %v1680 = vpop.permute.xlu0 %1679
      %1681 = vrot.lane.b32.xlu0 %v884, 48
      %v1682 = vpop.permute.xlu0 %1681
      %1683 = vrot.lane.b32.xlu0 %v885, 48
      %v1684 = vpop.permute.xlu0 %1683
      %1685 = vrot.lane.b32.xlu0 %v886, 48
      %v1686 = vpop.permute.xlu0 %1685
      %1751 = vrot.lane.b32.xlu0 %v887, 56
      %v1752 = vpop.permute.xlu0 %1751
      %1753 = vrot.lane.b32.xlu0 %v888, 56
      %v1754 = vpop.permute.xlu0 %1753
      %1755 = vrot.lane.b32.xlu0 %v889, 56
      %v1756 = vpop.permute.xlu0 %1755
      %1757 = vrot.lane.b32.xlu0 %v890, 56
      %v1758 = vpop.permute.xlu0 %1757
      %1759 = vrot.lane.b32.xlu0 %v891, 56
      %v1760 = vpop.permute.xlu0 %1759
      %1761 = vrot.lane.b32.xlu0 %v892, 56
      %v1762 = vpop.permute.xlu0 %1761
      %1763 = vrot.lane.b32.xlu0 %v893, 56
      %v1764 = vpop.permute.xlu0 %1763
      %1765 = vrot.lane.b32.xlu0 %v894, 56
      %v1766 = vpop.permute.xlu0 %1765
      %1767 = vrot.lane.b32.xlu0 %v895, 56
      %v1768 = vpop.permute.xlu0 %1767
      %1769 = vrot.lane.b32.xlu0 %v896, 56
      %v1770 = vpop.permute.xlu0 %1769
      %1771 = vrot.lane.b32.xlu0 %v897, 56
      %v1772 = vpop.permute.xlu0 %1771
      %1773 = vrot.lane.b32.xlu0 %v898, 56
      %v1774 = vpop.permute.xlu0 %1773
      %1775 = vrot.lane.b32.xlu0 %v899, 56
      %v1776 = vpop.permute.xlu0 %1775
      %1777 = vrot.lane.b32.xlu0 %v900, 56
      %v1778 = vpop.permute.xlu0 %1777
      %1779 = vrot.lane.b32.xlu0 %v901, 56
      %v1780 = vpop.permute.xlu0 %1779
      %1781 = vrot.lane.b32.xlu0 %v902, 56
      %v1782 = vpop.permute.xlu0 %1781
      %1783 = vrot.lane.b32.xlu0 %v903, 56
      %v1784 = vpop.permute.xlu0 %1783
      %1785 = vrot.lane.b32.xlu0 %v904, 56
      %v1786 = vpop.permute.xlu0 %1785
      %1787 = vrot.lane.b32.xlu0 %v905, 56
      %v1788 = vpop.permute.xlu0 %1787
      %1789 = vrot.lane.b32.xlu0 %v906, 56
      %v1790 = vpop.permute.xlu0 %1789
      %1791 = vrot.lane.b32.xlu0 %v907, 56
      %v1792 = vpop.permute.xlu0 %1791
      %1793 = vrot.lane.b32.xlu0 %v908, 56
      %v1794 = vpop.permute.xlu0 %1793
      %1795 = vrot.lane.b32.xlu0 %v909, 56
      %v1796 = vpop.permute.xlu0 %1795
      %1797 = vrot.lane.b32.xlu0 %v910, 56
      %v1798 = vpop.permute.xlu0 %1797
      %1799 = vrot.lane.b32.xlu0 %v911, 56
      %v1800 = vpop.permute.xlu0 %1799
      %1801 = vrot.lane.b32.xlu0 %v912, 56
      %v1802 = vpop.permute.xlu0 %1801
      %1803 = vrot.lane.b32.xlu0 %v913, 56
      %v1804 = vpop.permute.xlu0 %1803
      %1805 = vrot.lane.b32.xlu0 %v914, 56
      %v1806 = vpop.permute.xlu0 %1805
      %1807 = vrot.lane.b32.xlu0 %v915, 56
      %v1808 = vpop.permute.xlu0 %1807
      %1809 = vrot.lane.b32.xlu0 %v916, 56
      %v1810 = vpop.permute.xlu0 %1809
      %1811 = vrot.lane.b32.xlu0 %v917, 56
      %v1812 = vpop.permute.xlu0 %1811
      %1813 = vrot.lane.b32.xlu0 %v918, 56
      %v1814 = vpop.permute.xlu0 %1813
      %1879 = vrot.lane.b32.xlu0 %v919, 64
      %v1880 = vpop.permute.xlu0 %1879
      %1881 = vrot.lane.b32.xlu0 %v920, 64
      %v1882 = vpop.permute.xlu0 %1881
      %1883 = vrot.lane.b32.xlu0 %v921, 64
      %v1884 = vpop.permute.xlu0 %1883
      %1885 = vrot.lane.b32.xlu0 %v922, 64
      %v1886 = vpop.permute.xlu0 %1885
      %1887 = vrot.lane.b32.xlu0 %v923, 64
      %v1888 = vpop.permute.xlu0 %1887
      %1889 = vrot.lane.b32.xlu0 %v924, 64
      %v1890 = vpop.permute.xlu0 %1889
      %1891 = vrot.lane.b32.xlu0 %v925, 64
      %v1892 = vpop.permute.xlu0 %1891
      %1893 = vrot.lane.b32.xlu0 %v926, 64
      %v1894 = vpop.permute.xlu0 %1893
      %1895 = vrot.lane.b32.xlu0 %v927, 64
      %v1896 = vpop.permute.xlu0 %1895
      %1897 = vrot.lane.b32.xlu0 %v928, 64
      %v1898 = vpop.permute.xlu0 %1897
      %1899 = vrot.lane.b32.xlu0 %v929, 64
      %v1900 = vpop.permute.xlu0 %1899
      %1901 = vrot.lane.b32.xlu0 %v930, 64
      %v1902 = vpop.permute.xlu0 %1901
      %1903 = vrot.lane.b32.xlu0 %v931, 64
      %v1904 = vpop.permute.xlu0 %1903
      %1905 = vrot.lane.b32.xlu0 %v932, 64
      %v1906 = vpop.permute.xlu0 %1905
      %1907 = vrot.lane.b32.xlu0 %v933, 64
      %v1908 = vpop.permute.xlu0 %1907
      %1909 = vrot.lane.b32.xlu0 %v934, 64
      %v1910 = vpop.permute.xlu0 %1909
      %1911 = vrot.lane.b32.xlu0 %v935, 64
      %v1912 = vpop.permute.xlu0 %1911
      %1913 = vrot.lane.b32.xlu0 %v936, 64
      %v1914 = vpop.permute.xlu0 %1913
      %1915 = vrot.lane.b32.xlu0 %v937, 64
      %v1916 = vpop.permute.xlu0 %1915
      %1917 = vrot.lane.b32.xlu0 %v938, 64
      %v1918 = vpop.permute.xlu0 %1917
      %1919 = vrot.lane.b32.xlu0 %v939, 64
      %v1920 = vpop.permute.xlu0 %1919
      %1921 = vrot.lane.b32.xlu0 %v940, 64
      %v1922 = vpop.permute.xlu0 %1921
      %1923 = vrot.lane.b32.xlu0 %v941, 64
      %v1924 = vpop.permute.xlu0 %1923
      %1925 = vrot.lane.b32.xlu0 %v942, 64
      %v1926 = vpop.permute.xlu0 %1925
      %1927 = vrot.lane.b32.xlu0 %v943, 64
      %v1928 = vpop.permute.xlu0 %1927
      %1929 = vrot.lane.b32.xlu0 %v944, 64
      %v1930 = vpop.permute.xlu0 %1929
      %1931 = vrot.lane.b32.xlu0 %v945, 64
      %v1932 = vpop.permute.xlu0 %1931
      %1933 = vrot.lane.b32.xlu0 %v946, 64
      %v1934 = vpop.permute.xlu0 %1933
      %1935 = vrot.lane.b32.xlu0 %v947, 64
      %v1936 = vpop.permute.xlu0 %1935
      %1937 = vrot.lane.b32.xlu0 %v948, 64
      %v1938 = vpop.permute.xlu0 %1937
      %1939 = vrot.lane.b32.xlu0 %v949, 64
      %v1940 = vpop.permute.xlu0 %1939
      %1941 = vrot.lane.b32.xlu0 %v950, 64
      %v1942 = vpop.permute.xlu0 %1941
      %v1975 = vsel %vm573, %v662, %v984
      %v1976 = vsel %vm573, %v663, %v986
      %v1977 = vsel %vm573, %v664, %v988
      %v1978 = vsel %vm573, %v665, %v990
      %v1979 = vsel %vm573, %v666, %v992
      %v1980 = vsel %vm573, %v667, %v994
      %v1981 = vsel %vm573, %v668, %v996
      %v1982 = vsel %vm573, %v669, %v998
      %v1983 = vsel %vm573, %v670, %v1000
      %v1984 = vsel %vm573, %v671, %v1002
      %v1985 = vsel %vm573, %v672, %v1004
      %v1986 = vsel %vm573, %v673, %v1006
      %v1987 = vsel %vm573, %v674, %v1008
      %v1988 = vsel %vm573, %v675, %v1010
      %v1989 = vsel %vm573, %v676, %v1012
      %v1990 = vsel %vm573, %v677, %v1014
      %v1991 = vsel %vm573, %v678, %v1016
      %v1992 = vsel %vm573, %v679, %v1018
      %v1993 = vsel %vm573, %v680, %v1020
      %v1994 = vsel %vm573, %v681, %v1022
      %v1995 = vsel %vm573, %v682, %v1024
      %v1996 = vsel %vm573, %v683, %v1026
      %v1997 = vsel %vm573, %v684, %v1028
      %v1998 = vsel %vm573, %v685, %v1030
      %v1999 = vsel %vm573, %v686, %v1032
      %v2000 = vsel %vm573, %v687, %v1034
      %v2001 = vsel %vm573, %v688, %v1036
      %v2002 = vsel %vm573, %v689, %v1038
      %v2003 = vsel %vm573, %v690, %v1040
      %v2004 = vsel %vm573, %v691, %v1042
      %v2005 = vsel %vm573, %v692, %v1044
      %v2006 = vsel %vm573, %v693, %v1046
      %vm2007 = vcmask 130048
      %v2008 = vsel %vm2007, %v1975, %v1112
      %v2009 = vsel %vm2007, %v1976, %v1114
      %v2010 = vsel %vm2007, %v1977, %v1116
      %v2011 = vsel %vm2007, %v1978, %v1118
      %v2012 = vsel %vm2007, %v1979, %v1120
      %v2013 = vsel %vm2007, %v1980, %v1122
      %v2014 = vsel %vm2007, %v1981, %v1124
      %v2015 = vsel %vm2007, %v1982, %v1126
      %v2016 = vsel %vm2007, %v1983, %v1128
      %v2017 = vsel %vm2007, %v1984, %v1130
      %v2018 = vsel %vm2007, %v1985, %v1132
      %v2019 = vsel %vm2007, %v1986, %v1134
      %v2020 = vsel %vm2007, %v1987, %v1136
      %v2021 = vsel %vm2007, %v1988, %v1138
      %v2022 = vsel %vm2007, %v1989, %v1140
      %v2023 = vsel %vm2007, %v1990, %v1142
      %v2024 = vsel %vm2007, %v1991, %v1144
      %v2025 = vsel %vm2007, %v1992, %v1146
      %v2026 = vsel %vm2007, %v1993, %v1148
      %v2027 = vsel %vm2007, %v1994, %v1150
      %v2028 = vsel %vm2007, %v1995, %v1152
      %v2029 = vsel %vm2007, %v1996, %v1154
      %v2030 = vsel %vm2007, %v1997, %v1156
      %v2031 = vsel %vm2007, %v1998, %v1158
      %v2032 = vsel %vm2007, %v1999, %v1160
      %v2033 = vsel %vm2007, %v2000, %v1162
      %v2034 = vsel %vm2007, %v2001, %v1164
      %v2035 = vsel %vm2007, %v2002, %v1166
      %v2036 = vsel %vm2007, %v2003, %v1168
      %v2037 = vsel %vm2007, %v2004, %v1170
      %v2038 = vsel %vm2007, %v2005, %v1172
      %v2039 = vsel %vm2007, %v2006, %v1174
      %vm2040 = vcmask 195584
      %v2041 = vsel %vm2040, %v2008, %v1240
      %v2042 = vsel %vm2040, %v2009, %v1242
      %v2043 = vsel %vm2040, %v2010, %v1244
      %v2044 = vsel %vm2040, %v2011, %v1246
      %v2045 = vsel %vm2040, %v2012, %v1248
      %v2046 = vsel %vm2040, %v2013, %v1250
      %v2047 = vsel %vm2040, %v2014, %v1252
      %v2048 = vsel %vm2040, %v2015, %v1254
      %v2049 = vsel %vm2040, %v2016, %v1256
      %v2050 = vsel %vm2040, %v2017, %v1258
      %v2051 = vsel %vm2040, %v2018, %v1260
      %v2052 = vsel %vm2040, %v2019, %v1262
      %v2053 = vsel %vm2040, %v2020, %v1264
      %v2054 = vsel %vm2040, %v2021, %v1266
      %v2055 = vsel %vm2040, %v2022, %v1268
      %v2056 = vsel %vm2040, %v2023, %v1270
      %v2057 = vsel %vm2040, %v2024, %v1272
      %v2058 = vsel %vm2040, %v2025, %v1274
      %v2059 = vsel %vm2040, %v2026, %v1276
      %v2060 = vsel %vm2040, %v2027, %v1278
      %v2061 = vsel %vm2040, %v2028, %v1280
      %v2062 = vsel %vm2040, %v2029, %v1282
      %v2063 = vsel %vm2040, %v2030, %v1284
      %v2064 = vsel %vm2040, %v2031, %v1286
      %v2065 = vsel %vm2040, %v2032, %v1288
      %v2066 = vsel %vm2040, %v2033, %v1290
      %v2067 = vsel %vm2040, %v2034, %v1292
      %v2068 = vsel %vm2040, %v2035, %v1294
      %v2069 = vsel %vm2040, %v2036, %v1296
      %v2070 = vsel %vm2040, %v2037, %v1298
      %v2071 = vsel %vm2040, %v2038, %v1300
      %v2072 = vsel %vm2040, %v2039, %v1302
      %vm2073 = vcmask 261120
      %v2074 = vsel %vm2073, %v2041, %v1368
      %v2075 = vsel %vm2073, %v2042, %v1370
      %v2076 = vsel %vm2073, %v2043, %v1372
      %v2077 = vsel %vm2073, %v2044, %v1374
      %v2078 = vsel %vm2073, %v2045, %v1376
      %v2079 = vsel %vm2073, %v2046, %v1378
      %v2080 = vsel %vm2073, %v2047, %v1380
      %v2081 = vsel %vm2073, %v2048, %v1382
      %v2082 = vsel %vm2073, %v2049, %v1384
      %v2083 = vsel %vm2073, %v2050, %v1386
      %v2084 = vsel %vm2073, %v2051, %v1388
      %v2085 = vsel %vm2073, %v2052, %v1390
      %v2086 = vsel %vm2073, %v2053, %v1392
      %v2087 = vsel %vm2073, %v2054, %v1394
      %v2088 = vsel %vm2073, %v2055, %v1396
      %v2089 = vsel %vm2073, %v2056, %v1398
      %v2090 = vsel %vm2073, %v2057, %v1400
      %v2091 = vsel %vm2073, %v2058, %v1402
      %v2092 = vsel %vm2073, %v2059, %v1404
      %v2093 = vsel %vm2073, %v2060, %v1406
      %v2094 = vsel %vm2073, %v2061, %v1408
      %v2095 = vsel %vm2073, %v2062, %v1410
      %v2096 = vsel %vm2073, %v2063, %v1412
      %v2097 = vsel %vm2073, %v2064, %v1414
      %v2098 = vsel %vm2073, %v2065, %v1416
      %v2099 = vsel %vm2073, %v2066, %v1418
      %v2100 = vsel %vm2073, %v2067, %v1420
      %v2101 = vsel %vm2073, %v2068, %v1422
      %v2102 = vsel %vm2073, %v2069, %v1424
      %v2103 = vsel %vm2073, %v2070, %v1426
      %v2104 = vsel %vm2073, %v2071, %v1428
      %v2105 = vsel %vm2073, %v2072, %v1430
      %vm2106 = vcmask 326656
      %v2107 = vsel %vm2106, %v2074, %v1496
      %v2108 = vsel %vm2106, %v2075, %v1498
      %v2109 = vsel %vm2106, %v2076, %v1500
      %v2110 = vsel %vm2106, %v2077, %v1502
      %v2111 = vsel %vm2106, %v2078, %v1504
      %v2112 = vsel %vm2106, %v2079, %v1506
      %v2113 = vsel %vm2106, %v2080, %v1508
      %v2114 = vsel %vm2106, %v2081, %v1510
      %v2115 = vsel %vm2106, %v2082, %v1512
      %v2116 = vsel %vm2106, %v2083, %v1514
      %v2117 = vsel %vm2106, %v2084, %v1516
      %v2118 = vsel %vm2106, %v2085, %v1518
      %v2119 = vsel %vm2106, %v2086, %v1520
      %v2120 = vsel %vm2106, %v2087, %v1522
      %v2121 = vsel %vm2106, %v2088, %v1524
      %v2122 = vsel %vm2106, %v2089, %v1526
      %v2123 = vsel %vm2106, %v2090, %v1528
      %v2124 = vsel %vm2106, %v2091, %v1530
      %v2125 = vsel %vm2106, %v2092, %v1532
      %v2126 = vsel %vm2106, %v2093, %v1534
      %v2127 = vsel %vm2106, %v2094, %v1536
      %v2128 = vsel %vm2106, %v2095, %v1538
      %v2129 = vsel %vm2106, %v2096, %v1540
      %v2130 = vsel %vm2106, %v2097, %v1542
      %v2131 = vsel %vm2106, %v2098, %v1544
      %v2132 = vsel %vm2106, %v2099, %v1546
      %v2133 = vsel %vm2106, %v2100, %v1548
      %v2134 = vsel %vm2106, %v2101, %v1550
      %v2135 = vsel %vm2106, %v2102, %v1552
      %v2136 = vsel %vm2106, %v2103, %v1554
      %v2137 = vsel %vm2106, %v2104, %v1556
      %v2138 = vsel %vm2106, %v2105, %v1558
      %vm2139 = vcmask 392192
      %v2140 = vsel %vm2139, %v2107, %v1624
      %v2141 = vsel %vm2139, %v2108, %v1626
      %v2142 = vsel %vm2139, %v2109, %v1628
      %v2143 = vsel %vm2139, %v2110, %v1630
      %v2144 = vsel %vm2139, %v2111, %v1632
      %v2145 = vsel %vm2139, %v2112, %v1634
      %v2146 = vsel %vm2139, %v2113, %v1636
      %v2147 = vsel %vm2139, %v2114, %v1638
      %v2148 = vsel %vm2139, %v2115, %v1640
      %v2149 = vsel %vm2139, %v2116, %v1642
      %v2150 = vsel %vm2139, %v2117, %v1644
      %v2151 = vsel %vm2139, %v2118, %v1646
      %v2152 = vsel %vm2139, %v2119, %v1648
      %v2153 = vsel %vm2139, %v2120, %v1650
      %v2154 = vsel %vm2139, %v2121, %v1652
      %v2155 = vsel %vm2139, %v2122, %v1654
      %v2156 = vsel %vm2139, %v2123, %v1656
      %v2157 = vsel %vm2139, %v2124, %v1658
      %v2158 = vsel %vm2139, %v2125, %v1660
      %v2159 = vsel %vm2139, %v2126, %v1662
      %v2160 = vsel %vm2139, %v2127, %v1664
      %v2161 = vsel %vm2139, %v2128, %v1666
      %v2162 = vsel %vm2139, %v2129, %v1668
      %v2163 = vsel %vm2139, %v2130, %v1670
      %v2164 = vsel %vm2139, %v2131, %v1672
      %v2165 = vsel %vm2139, %v2132, %v1674
      %v2166 = vsel %vm2139, %v2133, %v1676
      %v2167 = vsel %vm2139, %v2134, %v1678
      %v2168 = vsel %vm2139, %v2135, %v1680
      %v2169 = vsel %vm2139, %v2136, %v1682
      %v2170 = vsel %vm2139, %v2137, %v1684
      %v2171 = vsel %vm2139, %v2138, %v1686
      %vm2172 = vcmask 457728
      %v2173 = vsel %vm2172, %v2140, %v1752
      %v2174 = vsel %vm2172, %v2141, %v1754
      %v2175 = vsel %vm2172, %v2142, %v1756
      %v2176 = vsel %vm2172, %v2143, %v1758
      %v2177 = vsel %vm2172, %v2144, %v1760
      %v2178 = vsel %vm2172, %v2145, %v1762
      %v2179 = vsel %vm2172, %v2146, %v1764
      %v2180 = vsel %vm2172, %v2147, %v1766
      %v2181 = vsel %vm2172, %v2148, %v1768
      %v2182 = vsel %vm2172, %v2149, %v1770
      %v2183 = vsel %vm2172, %v2150, %v1772
      %v2184 = vsel %vm2172, %v2151, %v1774
      %v2185 = vsel %vm2172, %v2152, %v1776
      %v2186 = vsel %vm2172, %v2153, %v1778
      %v2187 = vsel %vm2172, %v2154, %v1780
      %v2188 = vsel %vm2172, %v2155, %v1782
      %v2189 = vsel %vm2172, %v2156, %v1784
      %v2190 = vsel %vm2172, %v2157, %v1786
      %v2191 = vsel %vm2172, %v2158, %v1788
      %v2192 = vsel %vm2172, %v2159, %v1790
      %v2193 = vsel %vm2172, %v2160, %v1792
      %v2194 = vsel %vm2172, %v2161, %v1794
      %v2195 = vsel %vm2172, %v2162, %v1796
      %v2196 = vsel %vm2172, %v2163, %v1798
      %v2197 = vsel %vm2172, %v2164, %v1800
      %v2198 = vsel %vm2172, %v2165, %v1802
      %v2199 = vsel %vm2172, %v2166, %v1804
      %v2200 = vsel %vm2172, %v2167, %v1806
      %v2201 = vsel %vm2172, %v2168, %v1808
      %v2202 = vsel %vm2172, %v2169, %v1810
      %v2203 = vsel %vm2172, %v2170, %v1812
      %v2204 = vsel %vm2172, %v2171, %v1814
      %vm2205 = vcmask 523264
      %v2206 = vsel %vm2205, %v2173, %v1880
      %v2207 = vsel %vm2205, %v2174, %v1882
      %v2208 = vsel %vm2205, %v2175, %v1884
      %v2209 = vsel %vm2205, %v2176, %v1886
      %v2210 = vsel %vm2205, %v2177, %v1888
      %v2211 = vsel %vm2205, %v2178, %v1890
      %v2212 = vsel %vm2205, %v2179, %v1892
      %v2213 = vsel %vm2205, %v2180, %v1894
      %v2214 = vsel %vm2205, %v2181, %v1896
      %v2215 = vsel %vm2205, %v2182, %v1898
      %v2216 = vsel %vm2205, %v2183, %v1900
      %v2217 = vsel %vm2205, %v2184, %v1902
      %v2218 = vsel %vm2205, %v2185, %v1904
      %v2219 = vsel %vm2205, %v2186, %v1906
      %v2220 = vsel %vm2205, %v2187, %v1908
      %v2221 = vsel %vm2205, %v2188, %v1910
      %v2222 = vsel %vm2205, %v2189, %v1912
      %v2223 = vsel %vm2205, %v2190, %v1914
      %v2224 = vsel %vm2205, %v2191, %v1916
      %v2225 = vsel %vm2205, %v2192, %v1918
      %v2226 = vsel %vm2205, %v2193, %v1920
      %v2227 = vsel %vm2205, %v2194, %v1922
      %v2228 = vsel %vm2205, %v2195, %v1924
      %v2229 = vsel %vm2205, %v2196, %v1926
      %v2230 = vsel %vm2205, %v2197, %v1928
      %v2231 = vsel %vm2205, %v2198, %v1930
      %v2232 = vsel %vm2205, %v2199, %v1932
      %v2233 = vsel %vm2205, %v2200, %v1934
      %v2234 = vsel %vm2205, %v2201, %v1936
      %v2235 = vsel %vm2205, %v2202, %v1938
      %v2236 = vsel %vm2205, %v2203, %v1940
      %v2237 = vsel %vm2205, %v2204, %v1942
      %v2238 = vpack.c.bf16 %v2207, %v2206
      %v2239 = vpack.c.bf16 %v2209, %v2208
      %v2240 = vpack.c.bf16 %v2211, %v2210
      %v2241 = vpack.c.bf16 %v2213, %v2212
      %v2242 = vpack.c.bf16 %v2215, %v2214
      %v2243 = vpack.c.bf16 %v2217, %v2216
      %v2244 = vpack.c.bf16 %v2219, %v2218
      %v2245 = vpack.c.bf16 %v2221, %v2220
      %v2246 = vpack.c.bf16 %v2223, %v2222
      %v2247 = vpack.c.bf16 %v2225, %v2224
      %v2248 = vpack.c.bf16 %v2227, %v2226
      %v2249 = vpack.c.bf16 %v2229, %v2228
      %v2250 = vpack.c.bf16 %v2231, %v2230
      %v2251 = vpack.c.bf16 %v2233, %v2232
      %v2252 = vpack.c.bf16 %v2235, %v2234
      %v2253 = vpack.c.bf16 %v2237, %v2236
      %v2254 = vld [vmem:[%s3] sm:$0xf]
      %v2255 = vld [vmem:[%s3 + $0x4] sm:$0xf]
      %v2256 = vld [vmem:[%s3 + $0x8] sm:$0xf]
      %v2257 = vld [vmem:[%s3 + $0xc] sm:$0xf]
      %v2258 = vld [vmem:[%s3 + $0x10] sm:$0xf]
      %v2259 = vld [vmem:[%s3 + $0x14] sm:$0xf]
      %v2260 = vld [vmem:[%s3 + $0x18] sm:$0xf]
      %v2261 = vld [vmem:[%s3 + $0x1c] sm:$0xf]
      %v2262 = vld [vmem:[%s3 + $0x20] sm:$0xf]
      %v2263 = vld [vmem:[%s4] sm:$0x1]
      %v2265 = vperm.slane %v2263, 0
      %v2276 = vunpack.c.l.b16 %v2254
      %v2277 = vunpack.c.l.b16 %v2255
      %v2278 = vunpack.c.l.b16 %v2256
      %v2279 = vunpack.c.l.b16 %v2257
      %v2280 = vunpack.c.l.b16 %v2258
      %v2281 = vunpack.c.l.b16 %v2259
      %v2282 = vunpack.c.l.b16 %v2260
      %v2283 = vunpack.c.l.b16 %v2261
      %v2284 = vunpack.c.l.b16 %v2262
      %v2285 = vpack.c.b16 %v2277, %v2276
      %v2286 = vpack.c.b16 %v2279, %v2278
      %v2287 = vpack.c.b16 %v2281, %v2280
      %v2288 = vpack.c.b16 %v2283, %v2282
      %v2289 = vpack.c.b16 %v2284, %v2284
      %vm2294 = vcmask 588800
      %v2296 = vsel %vm2294, %v2238, 0
      %v2299 = vsel %vm2294, %v2239, 0
      %v2302 = vsel %vm2294, %v2240, 0
      %v2305 = vsel %vm2294, %v2241, 0
      %v2308 = vsel %vm2294, %v2242, 0
      %v2311 = vsel %vm2294, %v2243, 0
      %v2314 = vsel %vm2294, %v2244, 0
      %v2317 = vsel %vm2294, %v2245, 0
      %v2320 = vsel %vm2294, %v2246, 0
      %v2323 = vsel %vm2294, %v2247, 0
      %v2326 = vsel %vm2294, %v2248, 0
      %v2329 = vsel %vm2294, %v2249, 0
      %v2332 = vsel %vm2294, %v2250, 0
      %v2335 = vsel %vm2294, %v2251, 0
      %v2338 = vsel %vm2294, %v2252, 0
      %v2341 = vsel %vm2294, %v2253, 0
      %vm2343 = vcmask 1043456
      %v2345 = vsel %vm2343, %v2289, 0
      %2347 = vmatpush.bf16.msra.mxu0 0
      %2348 = vmatpush.bf16.msra.mxu0 0
      %2349 = vmatpush.bf16.msra.mxu0 0
      %2350 = vmatpush.bf16.msra.mxu0 %v2345
      %2351 = vmatpush.bf16.msra.mxu0 %v2288
      %2352 = vmatpush.bf16.msra.mxu0 %v2287
      %2353 = vmatpush.bf16.msra.mxu0 %v2286
      %2354 = vmatpush.bf16.msra.mxu0 %v2285
      %2355 = vmatmul.bf16.gmra.mxu0 %v2296
      %v2356 = vpop.f32.mrf.mxu0
      %v2357 = vadd.f32 %v2265, %v2356
      %v2358 = vpop.f32.mrf.mxu0
      %v2359 = vadd.f32 %v2265, %v2358
      %2360 = vmatmul.bf16.gmra.mxu0 %v2299
      %v2361 = vpop.f32.mrf.mxu0
      %v2362 = vadd.f32 %v2265, %v2361
      %v2363 = vpop.f32.mrf.mxu0
      %v2364 = vadd.f32 %v2265, %v2363
      %2365 = vmatmul.bf16.gmra.mxu0 %v2302
      %v2366 = vpop.f32.mrf.mxu0
      %v2367 = vadd.f32 %v2265, %v2366
      %v2368 = vpop.f32.mrf.mxu0
      %v2369 = vadd.f32 %v2265, %v2368
      %2370 = vmatmul.bf16.gmra.mxu0 %v2305
      %v2371 = vpop.f32.mrf.mxu0
      %v2372 = vadd.f32 %v2265, %v2371
      %v2373 = vpop.f32.mrf.mxu0
      %v2374 = vadd.f32 %v2265, %v2373
      %2375 = vmatmul.bf16.gmra.mxu0 %v2308
      %v2376 = vpop.f32.mrf.mxu0
      %v2377 = vadd.f32 %v2265, %v2376
      %v2378 = vpop.f32.mrf.mxu0
      %v2379 = vadd.f32 %v2265, %v2378
      %2380 = vmatmul.bf16.gmra.mxu0 %v2311
      %v2381 = vpop.f32.mrf.mxu0
      %v2382 = vadd.f32 %v2265, %v2381
      %v2383 = vpop.f32.mrf.mxu0
      %v2384 = vadd.f32 %v2265, %v2383
      %2385 = vmatmul.bf16.gmra.mxu0 %v2314
      %v2386 = vpop.f32.mrf.mxu0
      %v2387 = vadd.f32 %v2265, %v2386
      %v2388 = vpop.f32.mrf.mxu0
      %v2389 = vadd.f32 %v2265, %v2388
      %2390 = vmatmul.bf16.gmra.mxu0 %v2317
      %v2391 = vpop.f32.mrf.mxu0
      %v2392 = vadd.f32 %v2265, %v2391
      %v2393 = vpop.f32.mrf.mxu0
      %v2394 = vadd.f32 %v2265, %v2393
      %2395 = vmatmul.bf16.gmra.mxu0 %v2320
      %v2396 = vpop.f32.mrf.mxu0
      %v2397 = vadd.f32 %v2265, %v2396
      %v2398 = vpop.f32.mrf.mxu0
      %v2399 = vadd.f32 %v2265, %v2398
      %2400 = vmatmul.bf16.gmra.mxu0 %v2323
      %v2401 = vpop.f32.mrf.mxu0
      %v2402 = vadd.f32 %v2265, %v2401
      %v2403 = vpop.f32.mrf.mxu0
      %v2404 = vadd.f32 %v2265, %v2403
      %2405 = vmatmul.bf16.gmra.mxu0 %v2326
      %v2406 = vpop.f32.mrf.mxu0
      %v2407 = vadd.f32 %v2265, %v2406
      %v2408 = vpop.f32.mrf.mxu0
      %v2409 = vadd.f32 %v2265, %v2408
      %2410 = vmatmul.bf16.gmra.mxu0 %v2329
      %v2411 = vpop.f32.mrf.mxu0
      %v2412 = vadd.f32 %v2265, %v2411
      %v2413 = vpop.f32.mrf.mxu0
      %v2414 = vadd.f32 %v2265, %v2413
      %2415 = vmatmul.bf16.gmra.mxu0 %v2332
      %v2416 = vpop.f32.mrf.mxu0
      %v2417 = vadd.f32 %v2265, %v2416
      %v2418 = vpop.f32.mrf.mxu0
      %v2419 = vadd.f32 %v2265, %v2418
      %2420 = vmatmul.bf16.gmra.mxu0 %v2335
      %v2421 = vpop.f32.mrf.mxu0
      %v2422 = vadd.f32 %v2265, %v2421
      %v2423 = vpop.f32.mrf.mxu0
      %v2424 = vadd.f32 %v2265, %v2423
      %2425 = vmatmul.bf16.gmra.mxu0 %v2338
      %v2426 = vpop.f32.mrf.mxu0
      %v2427 = vadd.f32 %v2265, %v2426
      %v2428 = vpop.f32.mrf.mxu0
      %v2429 = vadd.f32 %v2265, %v2428
      %2430 = vmatmul.bf16.gmra.mxu0 %v2341
      %v2431 = vpop.f32.mrf.mxu0
      %v2432 = vadd.f32 %v2265, %v2431
      %v2433 = vpop.f32.mrf.mxu0
      %v2434 = vadd.f32 %v2265, %v2433
      %2435 = vdwg.mxu0
      %v2436 = vmax.f32 %v2357, 0.0
      %v2437 = vmax.f32 %v2359, 0.0
      %v2438 = vmax.f32 %v2362, 0.0
      %v2439 = vmax.f32 %v2364, 0.0
      %v2440 = vmax.f32 %v2367, 0.0
      %v2441 = vmax.f32 %v2369, 0.0
      %v2442 = vmax.f32 %v2372, 0.0
      %v2443 = vmax.f32 %v2374, 0.0
      %v2444 = vmax.f32 %v2377, 0.0
      %v2445 = vmax.f32 %v2379, 0.0
      %v2446 = vmax.f32 %v2382, 0.0
      %v2447 = vmax.f32 %v2384, 0.0
      %v2448 = vmax.f32 %v2387, 0.0
      %v2449 = vmax.f32 %v2389, 0.0
      %v2450 = vmax.f32 %v2392, 0.0
      %v2451 = vmax.f32 %v2394, 0.0
      %v2452 = vmax.f32 %v2397, 0.0
      %v2453 = vmax.f32 %v2399, 0.0
      %v2454 = vmax.f32 %v2402, 0.0
      %v2455 = vmax.f32 %v2404, 0.0
      %v2456 = vmax.f32 %v2407, 0.0
      %v2457 = vmax.f32 %v2409, 0.0
      %v2458 = vmax.f32 %v2412, 0.0
      %v2459 = vmax.f32 %v2414, 0.0
      %v2460 = vmax.f32 %v2417, 0.0
      %v2461 = vmax.f32 %v2419, 0.0
      %v2462 = vmax.f32 %v2422, 0.0
      %v2463 = vmax.f32 %v2424, 0.0
      %v2464 = vmax.f32 %v2427, 0.0
      %v2465 = vmax.f32 %v2429, 0.0
      %v2466 = vmax.f32 %v2432, 0.0
      %v2467 = vmax.f32 %v2434, 0.0
      %v2468 = vpack.c.bf16 %v2437, %v2436
      %v2469 = vpack.c.bf16 %v2439, %v2438
      %v2470 = vpack.c.bf16 %v2441, %v2440
      %v2471 = vpack.c.bf16 %v2443, %v2442
      %v2472 = vpack.c.bf16 %v2445, %v2444
      %v2473 = vpack.c.bf16 %v2447, %v2446
      %v2474 = vpack.c.bf16 %v2449, %v2448
      %v2475 = vpack.c.bf16 %v2451, %v2450
      %v2476 = vpack.c.bf16 %v2453, %v2452
      %v2477 = vpack.c.bf16 %v2455, %v2454
      %v2478 = vpack.c.bf16 %v2457, %v2456
      %v2479 = vpack.c.bf16 %v2459, %v2458
      %v2480 = vpack.c.bf16 %v2461, %v2460
      %v2481 = vpack.c.bf16 %v2463, %v2462
      %v2482 = vpack.c.bf16 %v2465, %v2464
      %v2483 = vpack.c.bf16 %v2467, %v2466
      %v2484 = vld [vmem:[%s5] sm:$0xf]
      %v2485 = vld [vmem:[%s6] sm:$0x3]
      %v2486 = vld [vmem:[%s7] sm:$0x1]
      %v2488 = vperm.slane %v2486, 0
      %v2491 = vsel %vm448, %v2485, 0
      %2493 = vmatpush.bf16.msra.mxu0 0
      %2494 = vmatpush.bf16.msra.mxu0 0
      %2495 = vmatpush.bf16.msra.mxu0 0
      %2496 = vmatpush.bf16.msra.mxu0 0
      %2497 = vmatpush.bf16.msra.mxu0 0
      %2498 = vmatpush.bf16.msra.mxu0 0
      %2499 = vmatpush.bf16.msra.mxu0 0
      %2500 = vmatpush.bf16.msra.mxu0 %v2491
      %2501 = vmatmul.bf16.gmra.mxu0 %v401
      %v2502 = vpop.f32.mrf.mxu0
      %v2503 = vadd.f32 %v2488, %v2502
      %v2504 = vpop.f32.mrf.mxu0
      %v2505 = vadd.f32 %v2488, %v2504
      %2506 = vmatmul.bf16.gmra.mxu0 %v404
      %v2507 = vpop.f32.mrf.mxu0
      %v2508 = vadd.f32 %v2488, %v2507
      %v2509 = vpop.f32.mrf.mxu0
      %v2510 = vadd.f32 %v2488, %v2509
      %2511 = vmatmul.bf16.gmra.mxu0 %v407
      %v2512 = vpop.f32.mrf.mxu0
      %v2513 = vadd.f32 %v2488, %v2512
      %v2514 = vpop.f32.mrf.mxu0
      %v2515 = vadd.f32 %v2488, %v2514
      %2516 = vmatmul.bf16.gmra.mxu0 %v410
      %v2517 = vpop.f32.mrf.mxu0
      %v2518 = vadd.f32 %v2488, %v2517
      %v2519 = vpop.f32.mrf.mxu0
      %v2520 = vadd.f32 %v2488, %v2519
      %2521 = vmatmul.bf16.gmra.mxu0 %v413
      %v2522 = vpop.f32.mrf.mxu0
      %v2523 = vadd.f32 %v2488, %v2522
      %v2524 = vpop.f32.mrf.mxu0
      %v2525 = vadd.f32 %v2488, %v2524
      %2526 = vmatmul.bf16.gmra.mxu0 %v416
      %v2527 = vpop.f32.mrf.mxu0
      %v2528 = vadd.f32 %v2488, %v2527
      %v2529 = vpop.f32.mrf.mxu0
      %v2530 = vadd.f32 %v2488, %v2529
      %2531 = vmatmul.bf16.gmra.mxu0 %v419
      %v2532 = vpop.f32.mrf.mxu0
      %v2533 = vadd.f32 %v2488, %v2532
      %v2534 = vpop.f32.mrf.mxu0
      %v2535 = vadd.f32 %v2488, %v2534
      %2536 = vmatmul.bf16.gmra.mxu0 %v422
      %v2537 = vpop.f32.mrf.mxu0
      %v2538 = vadd.f32 %v2488, %v2537
      %v2539 = vpop.f32.mrf.mxu0
      %v2540 = vadd.f32 %v2488, %v2539
      %2541 = vmatmul.bf16.gmra.mxu0 %v425
      %v2542 = vpop.f32.mrf.mxu0
      %v2543 = vadd.f32 %v2488, %v2542
      %v2544 = vpop.f32.mrf.mxu0
      %v2545 = vadd.f32 %v2488, %v2544
      %2546 = vmatmul.bf16.gmra.mxu0 %v428
      %v2547 = vpop.f32.mrf.mxu0
      %v2548 = vadd.f32 %v2488, %v2547
      %v2549 = vpop.f32.mrf.mxu0
      %v2550 = vadd.f32 %v2488, %v2549
      %2551 = vmatmul.bf16.gmra.mxu0 %v431
      %v2552 = vpop.f32.mrf.mxu0
      %v2553 = vadd.f32 %v2488, %v2552
      %v2554 = vpop.f32.mrf.mxu0
      %v2555 = vadd.f32 %v2488, %v2554
      %2556 = vmatmul.bf16.gmra.mxu0 %v434
      %v2557 = vpop.f32.mrf.mxu0
      %v2558 = vadd.f32 %v2488, %v2557
      %v2559 = vpop.f32.mrf.mxu0
      %v2560 = vadd.f32 %v2488, %v2559
      %2561 = vmatmul.bf16.gmra.mxu0 %v437
      %v2562 = vpop.f32.mrf.mxu0
      %v2563 = vadd.f32 %v2488, %v2562
      %v2564 = vpop.f32.mrf.mxu0
      %v2565 = vadd.f32 %v2488, %v2564
      %2566 = vmatmul.bf16.gmra.mxu0 %v440
      %v2567 = vpop.f32.mrf.mxu0
      %v2568 = vadd.f32 %v2488, %v2567
      %v2569 = vpop.f32.mrf.mxu0
      %v2570 = vadd.f32 %v2488, %v2569
      %2571 = vmatmul.bf16.gmra.mxu0 %v443
      %v2572 = vpop.f32.mrf.mxu0
      %v2573 = vadd.f32 %v2488, %v2572
      %v2574 = vpop.f32.mrf.mxu0
      %v2575 = vadd.f32 %v2488, %v2574
      %2576 = vmatmul.bf16.gmra.mxu0 %v446
      %v2577 = vpop.f32.mrf.mxu0
      %v2578 = vadd.f32 %v2488, %v2577
      %v2579 = vpop.f32.mrf.mxu0
      %v2580 = vadd.f32 %v2488, %v2579
      %2581 = vdwg.mxu0
      %v2583 = vsel %vm573, %v2468, 0
      %v2586 = vsel %vm573, %v2469, 0
      %v2589 = vsel %vm573, %v2470, 0
      %v2592 = vsel %vm573, %v2471, 0
      %v2595 = vsel %vm573, %v2472, 0
      %v2598 = vsel %vm573, %v2473, 0
      %v2601 = vsel %vm573, %v2474, 0
      %v2604 = vsel %vm573, %v2475, 0
      %v2607 = vsel %vm573, %v2476, 0
      %v2610 = vsel %vm573, %v2477, 0
      %v2613 = vsel %vm573, %v2478, 0
      %v2616 = vsel %vm573, %v2479, 0
      %v2619 = vsel %vm573, %v2480, 0
      %v2622 = vsel %vm573, %v2481, 0
      %v2625 = vsel %vm573, %v2482, 0
      %v2628 = vsel %vm573, %v2483, 0
      %v2631 = vsel %vm2343, %v2484, 0
      %2633 = vmatpush.bf16.msra.mxu0 0
      %2634 = vmatpush.bf16.msra.mxu0 0
      %2635 = vmatpush.bf16.msra.mxu0 0
      %2636 = vmatpush.bf16.msra.mxu0 0
      %2637 = vmatpush.bf16.msra.mxu0 0
      %2638 = vmatpush.bf16.msra.mxu0 0
      %2639 = vmatpush.bf16.msra.mxu0 0
      %2640 = vmatpush.bf16.msra.mxu0 %v2631
      %2641 = vmatmul.bf16.gmra.mxu0 %v2583
      %v2642 = vpop.f32.mrf.mxu0
      %v2643 = vadd.f32 %v2503, %v2642
      %v2644 = vpop.f32.mrf.mxu0
      %v2645 = vadd.f32 %v2505, %v2644
      %2646 = vmatmul.bf16.gmra.mxu0 %v2586
      %v2647 = vpop.f32.mrf.mxu0
      %v2648 = vadd.f32 %v2508, %v2647
      %v2649 = vpop.f32.mrf.mxu0
      %v2650 = vadd.f32 %v2510, %v2649
      %2651 = vmatmul.bf16.gmra.mxu0 %v2589
      %v2652 = vpop.f32.mrf.mxu0
      %v2653 = vadd.f32 %v2513, %v2652
      %v2654 = vpop.f32.mrf.mxu0
      %v2655 = vadd.f32 %v2515, %v2654
      %2656 = vmatmul.bf16.gmra.mxu0 %v2592
      %v2657 = vpop.f32.mrf.mxu0
      %v2658 = vadd.f32 %v2518, %v2657
      %v2659 = vpop.f32.mrf.mxu0
      %v2660 = vadd.f32 %v2520, %v2659
      %2661 = vmatmul.bf16.gmra.mxu0 %v2595
      %v2662 = vpop.f32.mrf.mxu0
      %v2663 = vadd.f32 %v2523, %v2662
      %v2664 = vpop.f32.mrf.mxu0
      %v2665 = vadd.f32 %v2525, %v2664
      %2666 = vmatmul.bf16.gmra.mxu0 %v2598
      %v2667 = vpop.f32.mrf.mxu0
      %v2668 = vadd.f32 %v2528, %v2667
      %v2669 = vpop.f32.mrf.mxu0
      %v2670 = vadd.f32 %v2530, %v2669
      %2671 = vmatmul.bf16.gmra.mxu0 %v2601
      %v2672 = vpop.f32.mrf.mxu0
      %v2673 = vadd.f32 %v2533, %v2672
      %v2674 = vpop.f32.mrf.mxu0
      %v2675 = vadd.f32 %v2535, %v2674
      %2676 = vmatmul.bf16.gmra.mxu0 %v2604
      %v2677 = vpop.f32.mrf.mxu0
      %v2678 = vadd.f32 %v2538, %v2677
      %v2679 = vpop.f32.mrf.mxu0
      %v2680 = vadd.f32 %v2540, %v2679
      %2681 = vmatmul.bf16.gmra.mxu0 %v2607
      %v2682 = vpop.f32.mrf.mxu0
      %v2683 = vadd.f32 %v2543, %v2682
      %v2684 = vpop.f32.mrf.mxu0
      %v2685 = vadd.f32 %v2545, %v2684
      %2686 = vmatmul.bf16.gmra.mxu0 %v2610
      %v2687 = vpop.f32.mrf.mxu0
      %v2688 = vadd.f32 %v2548, %v2687
      %v2689 = vpop.f32.mrf.mxu0
      %v2690 = vadd.f32 %v2550, %v2689
      %2691 = vmatmul.bf16.gmra.mxu0 %v2613
      %v2692 = vpop.f32.mrf.mxu0
      %v2693 = vadd.f32 %v2553, %v2692
      %v2694 = vpop.f32.mrf.mxu0
      %v2695 = vadd.f32 %v2555, %v2694
      %2696 = vmatmul.bf16.gmra.mxu0 %v2616
      %v2697 = vpop.f32.mrf.mxu0
      %v2698 = vadd.f32 %v2558, %v2697
      %v2699 = vpop.f32.mrf.mxu0
      %v2700 = vadd.f32 %v2560, %v2699
      %2701 = vmatmul.bf16.gmra.mxu0 %v2619
      %v2702 = vpop.f32.mrf.mxu0
      %v2703 = vadd.f32 %v2563, %v2702
      %v2704 = vpop.f32.mrf.mxu0
      %v2705 = vadd.f32 %v2565, %v2704
      %2706 = vmatmul.bf16.gmra.mxu0 %v2622
      %v2707 = vpop.f32.mrf.mxu0
      %v2708 = vadd.f32 %v2568, %v2707
      %v2709 = vpop.f32.mrf.mxu0
      %v2710 = vadd.f32 %v2570, %v2709
      %2711 = vmatmul.bf16.gmra.mxu0 %v2625
      %v2712 = vpop.f32.mrf.mxu0
      %v2713 = vadd.f32 %v2573, %v2712
      %v2714 = vpop.f32.mrf.mxu0
      %v2715 = vadd.f32 %v2575, %v2714
      %2716 = vmatmul.bf16.gmra.mxu0 %v2628
      %v2717 = vpop.f32.mrf.mxu0
      %v2718 = vadd.f32 %v2578, %v2717
      %v2719 = vpop.f32.mrf.mxu0
      %v2720 = vadd.f32 %v2580, %v2719
      %2721 = vdwg.mxu0
      %v2722 = vmax.f32 %v2643, 0.0
      %v2723 = vmax.f32 %v2645, 0.0
      %v2724 = vmax.f32 %v2648, 0.0
      %v2725 = vmax.f32 %v2650, 0.0
      %v2726 = vmax.f32 %v2653, 0.0
      %v2727 = vmax.f32 %v2655, 0.0
      %v2728 = vmax.f32 %v2658, 0.0
      %v2729 = vmax.f32 %v2660, 0.0
      %v2730 = vmax.f32 %v2663, 0.0
      %v2731 = vmax.f32 %v2665, 0.0
      %v2732 = vmax.f32 %v2668, 0.0
      %v2733 = vmax.f32 %v2670, 0.0
      %v2734 = vmax.f32 %v2673, 0.0
      %v2735 = vmax.f32 %v2675, 0.0
      %v2736 = vmax.f32 %v2678, 0.0
      %v2737 = vmax.f32 %v2680, 0.0
      %v2738 = vmax.f32 %v2683, 0.0
      %v2739 = vmax.f32 %v2685, 0.0
      %v2740 = vmax.f32 %v2688, 0.0
      %v2741 = vmax.f32 %v2690, 0.0
      %v2742 = vmax.f32 %v2693, 0.0
      %v2743 = vmax.f32 %v2695, 0.0
      %v2744 = vmax.f32 %v2698, 0.0
      %v2745 = vmax.f32 %v2700, 0.0
      %v2746 = vmax.f32 %v2703, 0.0
      %v2747 = vmax.f32 %v2705, 0.0
      %v2748 = vmax.f32 %v2708, 0.0
      %v2749 = vmax.f32 %v2710, 0.0
      %v2750 = vmax.f32 %v2713, 0.0
      %v2751 = vmax.f32 %v2715, 0.0
      %v2752 = vmax.f32 %v2718, 0.0
      %v2753 = vmax.f32 %v2720, 0.0
      %2754 = vxpose.xlu0.b32.start [1/16] %v2722, 128
      %2755 = vxpose.xlu0.b32.cont [2/16] %v2723, 128
      %2756 = vxpose.xlu0.b32.cont [3/16] %v2724, 128
      %2757 = vxpose.xlu0.b32.cont [4/16] %v2725, 128
      %2758 = vxpose.xlu0.b32.cont [5/16] %v2726, 128
      %2759 = vxpose.xlu0.b32.cont [6/16] %v2727, 128
      %2760 = vxpose.xlu0.b32.cont [7/16] %v2728, 128
      %2761 = vxpose.xlu0.b32.cont [8/16] %v2729, 128
      %2762 = vxpose.xlu0.b32.cont [9/16] %v2730, 128
      %2763 = vxpose.xlu0.b32.cont [10/16] %v2731, 128
      %2764 = vxpose.xlu0.b32.cont [11/16] %v2732, 128
      %2765 = vxpose.xlu0.b32.cont [12/16] %v2733, 128
      %2766 = vxpose.xlu0.b32.cont [13/16] %v2734, 128
      %2767 = vxpose.xlu0.b32.cont [14/16] %v2735, 128
      %2768 = vxpose.xlu0.b32.cont [15/16] %v2736, 128
      %2769 = vxpose.xlu0.b32.end [16/16] %v2737, 128
      %v2770 = vpop.trf.xlu0
      %v2771 = vpop.trf.xlu0
      %v2772 = vpop.trf.xlu0
      %v2773 = vpop.trf.xlu0
      %v2774 = vpop.trf.xlu0
      %v2775 = vpop.trf.xlu0
      %v2776 = vpop.trf.xlu0
      %v2777 = vpop.trf.xlu0
      %v2778 = vpop.trf.xlu0
      %v2779 = vpop.trf.xlu0
      %v2780 = vpop.trf.xlu0
      %v2781 = vpop.trf.xlu0
      %v2782 = vpop.trf.xlu0
      %v2783 = vpop.trf.xlu0
      %v2784 = vpop.trf.xlu0
      %v2785 = vpop.trf.xlu0
      %2786 = vxpose.xlu0.b32.start [1/16] %v2738, 128
      %2787 = vxpose.xlu0.b32.cont [2/16] %v2739, 128
      %2788 = vxpose.xlu0.b32.cont [3/16] %v2740, 128
      %2789 = vxpose.xlu0.b32.cont [4/16] %v2741, 128
      %2790 = vxpose.xlu0.b32.cont [5/16] %v2742, 128
      %2791 = vxpose.xlu0.b32.cont [6/16] %v2743, 128
      %2792 = vxpose.xlu0.b32.cont [7/16] %v2744, 128
      %2793 = vxpose.xlu0.b32.cont [8/16] %v2745, 128
      %2794 = vxpose.xlu0.b32.cont [9/16] %v2746, 128
      %2795 = vxpose.xlu0.b32.cont [10/16] %v2747, 128
      %2796 = vxpose.xlu0.b32.cont [11/16] %v2748, 128
      %2797 = vxpose.xlu0.b32.cont [12/16] %v2749, 128
      %2798 = vxpose.xlu0.b32.cont [13/16] %v2750, 128
      %2799 = vxpose.xlu0.b32.cont [14/16] %v2751, 128
      %2800 = vxpose.xlu0.b32.cont [15/16] %v2752, 128
      %2801 = vxpose.xlu0.b32.end [16/16] %v2753, 128
      %v2802 = vpop.trf.xlu0
      %v2803 = vpop.trf.xlu0
      %v2804 = vpop.trf.xlu0
      %v2805 = vpop.trf.xlu0
      %v2806 = vpop.trf.xlu0
      %v2807 = vpop.trf.xlu0
      %v2808 = vpop.trf.xlu0
      %v2809 = vpop.trf.xlu0
      %v2810 = vpop.trf.xlu0
      %v2811 = vpop.trf.xlu0
      %v2812 = vpop.trf.xlu0
      %v2813 = vpop.trf.xlu0
      %v2814 = vpop.trf.xlu0
      %v2815 = vpop.trf.xlu0
      %v2816 = vpop.trf.xlu0
      %v2817 = vpop.trf.xlu0
      %2818 = vst [vmem:[%s305] sm:$0xff] %v2770
      %2819 = vst [vmem:[%s305 + $0x8] sm:$0xff] %v2802
      %p2820 = scmp.lt.s32.totalorder %s19, 1
      %s2821 = scalar_select %p2820, %s19, 1
      %s2822 = smul.addr %s2821, 2
      %s2823 = smul.addr %s2822, 8
      %s2824 = scalar_lea.vmem %s8, %s2823
      // Predicated region
      $region53: #{bottleneck_forward.1} parent=51 // pred_check
        %p2825 = pneg %p210
      $region54: #{bottleneck_forward.1} parent=51 // pred_check_branch
        %2827 = sbr.rel (%p2825) target = $region56
      $region55: #{bottleneck_forward.1} parent=51 // pred_region
        _
      $region56: #{bottleneck_forward.1} parent=51 // pred_fallthru
        _
    $region52: #{bottleneck_forward.1} parent=5 // pred_fallthru
      _
    %p2828 = scmp.le.s32.totalorder 2, %s14
    // Predicated region
    $region57: #{bottleneck_forward.1} parent=5 // pred_check
      %p2829 = pneg %p2828
    $region58: #{bottleneck_forward.1} parent=5 // pred_check_branch
      %2831 = sbr.rel (%p2829) target = $region60
    $region59: #{bottleneck_forward.1} parent=5 // pred_region
      %s2832 = ssub.s32 %s14, 2
      // Predicated region
      $region61: #{bottleneck_forward.1} parent=59 // pred_check
        %p2833 = pneg %p216
      $region62: #{bottleneck_forward.1} parent=59 // pred_check_branch
        %2835 = sbr.rel (%p2833) target = $region64
      $region63: #{bottleneck_forward.1} parent=59 // pred_region
        %p2836 = scmp.lt.s32.totalorder %s20, 1
        %s2837 = scalar_select %p2836, %s20, 1
        %s2838 = smul.addr %s2837, 2
        %s2839 = smul.addr %s2838, 8
        %s2840 = scalar_lea.vmem %s8, %s2839
      $region64: #{bottleneck_forward.1} parent=59 // pred_fallthru
        _
    $region60: #{bottleneck_forward.1} parent=5 // pred_fallthru
      _
  $region6: #{bottleneck_forward.1} parent=0 // loop_footer
    %s18 = sadd.s32 1, %s14
  $region7: #{bottleneck_forward.1} parent=0 // loop_footer_branch
    %13 = sbr.rel target = $region3
  $region8: #{bottleneck_forward.1} parent=0 // loop_exit
    _

</llo_original>
